<compile_context>
chip_gen: v5e
topology: v5e:2x2
jax: 0.10.0
libtpu: 0.0.40
codegen_flags: <defaults>
</compile_context>

<pallas_src>
import functools
import math

import jax
import jax.numpy as jnp
from jax.experimental import pallas as pl
from jax.experimental.pallas import tpu as pltpu


# --------------------------- per-generation VMEM limit ---------------------------

def _default_vmem_limit():
    try:
        cap = int(pltpu.get_tpu_info().vmem_capacity_bytes)
    except Exception:
        cap = 64 * 1024 * 1024          # conservative (v7x per-TC VMEM)
    return max(32 * 1024 * 1024, min(cap * 3 // 4, 100 * 1024 * 1024))


_VMEM_LIMIT = _default_vmem_limit()


def _compiler_params(*semantics):
    return pltpu.CompilerParams(dimension_semantics=tuple(semantics),
                                vmem_limit_bytes=_VMEM_LIMIT)


def _pick_block(n, target, multiple):
    """Largest block <= target that divides n and is a multiple of `multiple`
    (falls back to the full dimension, which is always a legal block size).
    TODO(synk): pad ragged dimensions instead of falling back to one giant block."""
    if n <= target:
        return n
    start = target - (target % multiple)
    for cand in range(start, multiple - 1, -multiple):
        if n % cand == 0:
            return cand
    return n


def _col_block(d_out):
    # multiple of 256 when possible (v6e/v7x MXU tiles), 128 otherwise (v5e).
    return _pick_block(d_out, 1024, 256 if d_out % 256 == 0 else 128)


def _layer_norm(t, gamma, beta):
    mu = jnp.mean(t, axis=-1, keepdims=True)
    xc = t - mu
    var = jnp.mean(xc * xc, axis=-1, keepdims=True)
    return xc * jax.lax.rsqrt(var + 1e-5) * gamma + beta


# ------------------------- pltpu.roll direction probing --------------------------

def _probe_roll_direction():
    """Determine pltpu.roll's rotation convention with a tiny on-device kernel."""
    def _k(x_ref, o_ref):
        o_ref[...] = pltpu.roll(x_ref[...], 1, axis=1)
    try:
        x = jax.lax.broadcasted_iota(jnp.float32, (8, 128), 1)
        y = pl.pallas_call(_k, out_shape=jax.ShapeDtypeStruct((8, 128), jnp.float32))(x)
        v = float(jax.device_get(y)[0, 0])
        if v == 127.0:
            return "jnp"        # out[j] = in[(j - shift) % n]
        if v == 1.0:
            return "neg"        # out[j] = in[(j + shift) % n]
    except Exception:
        pass
    return "concat"


_ROLL_MODE = _probe_roll_direction()


def _rotate_left(x, shift, mode):
    """Left-rotate along the last axis: out[..., j] = x[..., (j + shift) % n]."""
    n = x.shape[-1]
    shift = shift % n
    if shift == 0:
        return x
    if mode == "jnp":
        return pltpu.roll(x, n - shift, axis=x.ndim - 1)
    if mode == "neg":
        return pltpu.roll(x, shift, axis=x.ndim - 1)
    return jnp.concatenate([x[..., shift:], x[..., :shift]], axis=-1)


# ---------------- fused (residual-add +) LayerNorm + matmul kernel ----------------

def _ln_matmul_kernel(*refs, add_residual, relu, return_normed):
    it = iter(refs)
    x_ref = next(it)
    r_ref = next(it) if add_residual else None
    g_ref, be_ref, w_ref, b_ref = next(it), next(it), next(it), next(it)
    outs = list(it)

    t = x_ref[...].astype(jnp.float32)
    if add_residual:
        t = t + r_ref[...].astype(jnp.float32)
    h = _layer_norm(t, g_ref[...], be_ref[...])

    y = jnp.dot(h.astype(w_ref.dtype), w_ref[...],
                preferred_element_type=jnp.float32) + b_ref[...]
    if relu:
        y = jnp.maximum(y, 0.0)

    if return_normed:
        @pl.when(pl.program_id(1) == 0)       # constant across the column axis
        def _():
            outs[0][...] = h.astype(outs[0].dtype)
        outs[1][...] = y.astype(outs[1].dtype)
    else:
        outs[0][...] = y.astype(outs[0].dtype)


def ln_matmul(x, res, gamma, beta, w, b, *, relu=False, return_normed=False,
              y_dtype=jnp.float32):
    """h = LN(x [+ res]); y = [relu](h @ W + b).  Returns (h, y) or y.
    Column-tiled over d_out so only a (d, bn) weight slab is resident."""
    n, d = x.shape
    d_out = w.shape[1]
    br = _pick_block(n, 512, 8)
    bn = _col_block(d_out)
    grid = (n // br, d_out // bn)

    row_spec = pl.BlockSpec((br, d), lambda i, j: (i, 0))
    vec_spec = pl.BlockSpec((1, d), lambda i, j: (0, 0))

    inputs = [x]
    in_specs = [row_spec]
    if res is not None:
        inputs.append(res)
        in_specs.append(row_spec)
    inputs += [gamma.reshape(1, d), beta.reshape(1, d), w, b.reshape(1, d_out)]
    in_specs += [vec_spec, vec_spec,
                 pl.BlockSpec((d, bn), lambda i, j: (0, j)),
                 pl.BlockSpec((1, bn), lambda i, j: (0, j))]

    y_shape = jax.ShapeDtypeStruct((n, d_out), y_dtype)
    y_spec = pl.BlockSpec((br, bn), lambda i, j: (i, j))
    if return_normed:
        out_shape = (jax.ShapeDtypeStruct((n, d), jnp.float32), y_shape)
        out_specs = (row_spec, y_spec)
    else:
        out_shape = y_shape
        out_specs = y_spec

    kernel = functools.partial(_ln_matmul_kernel, add_residual=res is not None,
                               relu=relu, return_normed=return_normed)
    return pl.pallas_call(
        kernel,
        out_shape=out_shape,
        grid=grid,
        in_specs=in_specs,
        out_specs=out_specs,
        compiler_params=_compiler_params("parallel", "arbitrary"),
    )(*inputs)


# ----------------------------- matmul + residual ---------------------------------

def _matmul_res_kernel(x_ref, r_ref, w_ref, b_ref, o_ref):
    y = r_ref[...].astype(jnp.float32) + b_ref[...] + jnp.dot(
        x_ref[...].astype(w_ref.dtype), w_ref[...],
        preferred_element_type=jnp.float32)
    o_ref[...] = y.astype(o_ref.dtype)


def matmul_residual(x, res, w, b):
    """y = res + x @ W + b (column-tiled over d_out)."""
    n, k = x.shape
    d_out = w.shape[1]
    br = _pick_block(n, 512, 8)
    bn = _col_block(d_out)
    grid = (n // br, d_out // bn)

    return pl.pallas_call(
        _matmul_res_kernel,
        out_shape=jax.ShapeDtypeStruct((n, d_out), jnp.float32),
        grid=grid,
        in_specs=[pl.BlockSpec((br, k), lambda i, j: (i, 0)),
                  pl.BlockSpec((br, bn), lambda i, j: (i, j)),
                  pl.BlockSpec((k, bn), lambda i, j: (0, j)),
                  pl.BlockSpec((1, bn), lambda i, j: (0, j))],
        out_specs=pl.BlockSpec((br, bn), lambda i, j: (i, j)),
        compiler_params=_compiler_params("parallel", "parallel"),
    )(x, res, w, b.reshape(1, d_out))


# ------------------------- multi-head relative attention -------------------------

def _attention_kernel(q_ref, k_ref, v_ref, er_ref, o_ref, *, roll_mode):
    s, dh = q_ref.shape
    q = q_ref[...]                 # (S, dh) bf16, lane-dense (head-major layout)
    k = k_ref[...]
    v = v_ref[...]
    er_rev = er_ref[...]           # (S, dh) bf16; er_rev[r] = er[S-1-r]

    row = jax.lax.broadcasted_iota(jnp.int32, (s, s), 0)
    col = jax.lax.broadcasted_iota(jnp.int32, (s, s), 1)
    future = col > row
    amount = (s - 1) - row                          # per-row left-rotation for the skew

    # content and relative-position scores both ride the MXU (bf16 in, f32 accumulate)
    scores = jax.lax.dot_general(q, k, (((1,), (1,)), ((), ())),
                                 preferred_element_type=jnp.float32)
    qe = jax.lax.dot_general(q, er_rev, (((1,), (1,)), ((), ())),
                             preferred_element_type=jnp.float32)

    # barrel-shift skew: rel[i, j] = qe[i, (j + s-1-i) mod s] = q_i . er[i-j] for j<=i
    # (positions j > i get wrapped-around values, masked to -inf below — same as the
    #  reference flip/pad/reshape trick).
    rel = qe
    n_bits = max(1, (s - 1).bit_length())
    for bit in range(n_bits):
        shift = 1 << bit
        if shift >= s:
            break
        rolled = _rotate_left(rel, shift, roll_mode)
        rel = jnp.where((amount & shift) != 0, rolled, rel)

    att = (scores + rel) * (1.0 / math.sqrt(dh))
    att = jnp.where(future, -jnp.inf, att)
    att = att - jnp.max(att, axis=-1, keepdims=True)
    p = jnp.exp(att)
    p = p / jnp.sum(p, axis=-1, keepdims=True)      # exact division (validation-safe)

    out = jnp.dot(p.astype(v.dtype), v, preferred_element_type=jnp.float32)
    o_ref[...] = out.astype(o_ref.dtype)


def multihead_attention(q, k, v, er_rev):
    """q/k/v: (B, H, S, dh) head-major bf16; er_rev: (S, dh) bf16.  Grid over (B, H)
    so one (S, S) score matrix is live per step and B*H feeds both v7x cores."""
    b, h, s, dh = q.shape
    roll_mode = _ROLL_MODE if (s >= 128 and s % 128 == 0) else "concat"
    kernel = functools.partial(_attention_kernel, roll_mode=roll_mode)

    blk = pl.BlockSpec((None, None, s, dh), lambda bi, hi: (bi, hi, 0, 0))
    return pl.pallas_call(
        kernel,
        out_shape=jax.ShapeDtypeStruct((b, h, s, dh), jnp.float32),
        grid=(b, h),
        in_specs=[blk, blk, blk,
                  pl.BlockSpec((s, dh), lambda bi, hi: (0, 0))],
        out_specs=blk,
        compiler_params=_compiler_params("parallel", "parallel"),
    )(q, k, v, er_rev)


# ------------------ Generator: final LN + Linear + log_softmax -------------------
# Pass 1: online logsumexp over vocab tiles (only an (n,1) lse written, once).
# Pass 2: recompute each logits tile and write log-probs — single (n, vocab) write.

def _gen_lse_kernel(x_ref, g_ref, be_ref, w_ref, b_ref, lse_ref, m_sc, l_sc):
    j = pl.program_id(1)

    @pl.when(j == 0)
    def _():
        m_sc[...] = jnp.full(m_sc.shape, -jnp.inf, jnp.float32)
        l_sc[...] = jnp.zeros(l_sc.shape, jnp.float32)

    h = _layer_norm(x_ref[...], g_ref[...], be_ref[...])
    y = jnp.dot(h.astype(w_ref.dtype), w_ref[...],
                preferred_element_type=jnp.float32) + b_ref[...]

    m_prev = m_sc[...]
    m_new = jnp.maximum(m_prev, jnp.max(y, axis=-1, keepdims=True))
    l_sc[...] = l_sc[...] * jnp.exp(m_prev - m_new) + \
        jnp.sum(jnp.exp(y - m_new), axis=-1, keepdims=True)
    m_sc[...] = m_new

    @pl.when(j == pl.num_programs(1) - 1)       # one guarded lse store per row block
    def _():
        lse_ref[...] = m_sc[...] + jnp.log(l_sc[...])


def _gen_out_kernel(x_ref, g_ref, be_ref, w_ref, b_ref, lse_ref, o_ref):
    h = _layer_norm(x_ref[...], g_ref[...], be_ref[...])
    y = jnp.dot(h.astype(w_ref.dtype), w_ref[...],
                preferred_element_type=jnp.float32) + b_ref[...]
    o_ref[...] = (y - lse_ref[...]).astype(o_ref.dtype)


def generator(x, gamma, beta, w, b):
    n, d = x.shape
    v = w.shape[1]
    br = _pick_block(n, 512, 8)
    bv = _col_block(v)
    grid = (n // br, v // bv)

    x_spec = pl.BlockSpec((br, d), lambda i, j: (i, 0))
    g_spec = pl.BlockSpec((1, d), lambda i, j: (0, 0))
    w_spec = pl.BlockSpec((d, bv), lambda i, j: (0, j))
    b_spec = pl.BlockSpec((1, bv), lambda i, j: (0, j))
    lse_spec = pl.BlockSpec((br, 1), lambda i, j: (i, 0))

    gamma2, beta2, b2 = gamma.reshape(1, d), beta.reshape(1, d), b.reshape(1, v)

    lse = pl.pallas_call(
        _gen_lse_kernel,
        out_shape=jax.ShapeDtypeStruct((n, 1), jnp.float32),
        grid=grid,
        in_specs=[x_spec, g_spec, g_spec, w_spec, b_spec],
        out_specs=lse_spec,
        scratch_shapes=[pltpu.VMEM((br, 1), jnp.float32),
                        pltpu.VMEM((br, 1), jnp.float32)],
        compiler_params=_compiler_params("parallel", "arbitrary"),
    )(x, gamma2, beta2, w, b2)

    return pl.pallas_call(
        _gen_out_kernel,
        out_shape=jax.ShapeDtypeStruct((n, v), jnp.float32),
        grid=grid,
        in_specs=[x_spec, g_spec, g_spec, w_spec, b_spec, lse_spec],
        out_specs=pl.BlockSpec((br, bv), lambda i, j: (i, j)),
        compiler_params=_compiler_params("parallel", "parallel"),
    )(x, gamma2, beta2, w, b2, lse)


# --------------------------------- model forward ---------------------------------

@functools.partial(jax.jit, static_argnames=("n_heads",))
def transformer_forward(params, tokens, *, n_heads):
    b, s = tokens.shape
    d = params["embedding"].shape[1]
    dh = d // n_heads

    # Embedding lookup * sqrt(d_model)  (gather stays in XLA; pure glue)
    x = (params["embedding"][tokens] * jnp.sqrt(jnp.float32(d))).reshape(b * s, d)

    for layer in params["layers"]:
        # Relative-position table for this (static) seq length: clip rule of the
        # reference er[t] = rel[min(t, max_rel-1)], reversed so the in-kernel skew
        # is a pure left-rotation.  Tiny (S, dh) gather; Wqkv fused at init time.
        rel = layer["rel"]
        max_rel = rel.shape[0]
        er_rev = rel[jnp.minimum(jnp.arange(s), max_rel - 1)][::-1].astype(jnp.bfloat16)

        # h1 = LN1(x); qkv = h1 @ Wqkv + bqkv (single fused kernel, bf16 output —
        # qkv only feeds the attention matmuls).
        h1, qkv = ln_matmul(x, None, layer["ln1_g"], layer["ln1_b"],
                            layer["wqkv"], layer["bqkv"],
                            return_normed=True, y_dtype=jnp.bfloat16)

        # Head-major layout so every per-head attention block is lane-dense.
        qkv4 = qkv.reshape(b, s, 3, n_heads, dh)
        q = qkv4[:, :, 0].transpose(0, 2, 1, 3)
        k = qkv4[:, :, 1].transpose(0, 2, 1, 3)
        v = qkv4[:, :, 2].transpose(0, 2, 1, 3)
        attn = multihead_attention(q, k, v, er_rev)           # (B, H, S, dh) f32
        attn = attn.transpose(0, 2, 1, 3).reshape(b * s, d)

        # x2 = h1 + attn; h2 = LN2(x2); ff1 = relu(h2 @ W1 + b1)
        h2, ff1 = ln_matmul(attn, h1, layer["ln2_g"], layer["ln2_b"],
                            layer["w1"], layer["b1"], relu=True,
                            return_normed=True, y_dtype=jnp.bfloat16)

        # x = h2 + ff1 @ W2 + b2
        x = matmul_residual(ff1, h2, layer["w2"], layer["b2"])

    # Final encoder LayerNorm is fused into the generator (Linear + log_softmax).
    y = generator(x, params["lnf_g"], params["lnf_b"], params["wg"], params["bg"])
    return y.reshape(b, s, -1)


# -------------------------------- parameter init ---------------------------------

def _xavier(key, shape):
    fan_in, fan_out = shape[0], shape[1]
    a = math.sqrt(6.0 / (fan_in + fan_out))
    return jax.random.uniform(key, shape, jnp.float32, -a, a)


def _bias(key, shape, fan_in):
    a = 1.0 / math.sqrt(fan_in)
    return jax.random.uniform(key, shape, jnp.float32, -a, a)


def init_params(key, *, n_tokens, d_model, d_ff, n_heads, n_layers, max_rel,
                weight_dtype=jnp.bfloat16):
    dh = d_model // n_heads
    k_emb, k_gen, *k_layers = jax.random.split(key, 2 + n_layers)
    kg = jax.random.split(k_gen, 2)

    params = {
        "embedding": _xavier(k_emb, (n_tokens, d_model)),
        "lnf_g": jnp.ones((d_model,), jnp.float32),
        "lnf_b": jnp.zeros((d_model,), jnp.float32),
        "wg": _xavier(kg[0], (d_model, n_tokens)).astype(weight_dtype),
        "bg": _bias(kg[1], (n_tokens,), d_model),
        "layers": [],
    }

    for kl in k_layers:
        kk = jax.random.split(kl, 11)
        wq, wk, wv = (_xavier(kk[0], (d_model, d_model)),
                      _xavier(kk[2], (d_model, d_model)),
                      _xavier(kk[4], (d_model, d_model)))
        bq, bk, bv = (_bias(kk[1], (d_model,), d_model),
                      _bias(kk[3], (d_model,), d_model),
                      _bias(kk[5], (d_model,), d_model))
        params["layers"].append({
            # QKV pre-fused at parameter-prep time (no per-step concatenation in jit).
            "wqkv": jnp.concatenate([wq, wk, wv], axis=1).astype(weight_dtype),
            "bqkv": jnp.concatenate([bq, bk, bv]),
            "rel": _xavier(kk[6], (max_rel, dh)),
            "w1": _xavier(kk[7], (d_model, d_ff)).astype(weight_dtype),
            "b1": _bias(kk[8], (d_ff,), d_model),
            "w2": _xavier(kk[9], (d_ff, d_model)).astype(weight_dtype),
            "b2": _bias(kk[10], (d_model,), d_ff),
            "ln1_g": jnp.ones((d_model,), jnp.float32),
            "ln1_b": jnp.zeros((d_model,), jnp.float32),
            "ln2_g": jnp.ones((d_model,), jnp.float32),
            "ln2_b": jnp.zeros((d_model,), jnp.float32),
        })
    return params


# -------------------------------------- main --------------------------------------

if __name__ == "__main__":
    B, S = 2, 8
    N_TOKENS = 11
    D_MODEL = 32
    D_FF = 64
    N_HEADS = 4
    N_LAYERS = 2
    MAX_SEQUENCE = 16   # -> max_relative_position

    root = jax.random.PRNGKey(0)
    k_param, k_tok = jax.random.split(root)

    params = init_params(k_param, n_tokens=N_TOKENS, d_model=D_MODEL, d_ff=D_FF,
                         n_heads=N_HEADS, n_layers=N_LAYERS, max_rel=MAX_SEQUENCE)
    tokens = jax.random.randint(k_tok, (B, S), 0, N_TOKENS, dtype=jnp.int32)

    out = transformer_forward(params, tokens, n_heads=N_HEADS)
    out = jax.block_until_ready(out)

    assert out.shape == (B, S, N_TOKENS)
    assert bool(jnp.all(jnp.isfinite(out))), "non-finite output"
    row_sums = jnp.exp(out).sum(-1)
    assert bool(jnp.allclose(row_sums, 1.0, atol=1e-4)), "log_softmax rows do not sum to 1"

    print("KERNEL_OK")
</pallas_src>

<mosaic_0001>
module attributes {stable_mosaic.version = 11 : i64} {
  func.func @_k(%arg0: memref<8x128xf32, #tpu.memory_space<vmem>>, %arg1: memref<8x128xf32, #tpu.memory_space<vmem>>) attributes {dimension_semantics = [], scalar_prefetch = 0 : i64, scratch_operands = 0 : i64, tpu.core_type = #tpu.core_type<tc>} {
    %c0 = arith.constant 0 : index
    %c0_0 = arith.constant 0 : index
    %0 = vector.load %arg0[%c0, %c0_0] : memref<8x128xf32, #tpu.memory_space<vmem>>, vector<8x128xf32>
    %c1_i32 = arith.constant 1 : i32
    %1 = tpu.dynamic_rotate %0 by %c1_i32 dim 1 : vector<8x128xf32>, i32 -> vector<8x128xf32>
    %c0_1 = arith.constant 0 : index
    %c0_2 = arith.constant 0 : index
    %2 = vector.load %arg1[%c0_1, %c0_2] : memref<8x128xf32, #tpu.memory_space<vmem>>, vector<8x128xf32>
    tpu.vector_store %arg1[%c0_1, %c0_2], %1 {strides = array<i32>} : memref<8x128xf32, #tpu.memory_space<vmem>>, vector<8x128xf32>,
    return
  }
}

module attributes {stable_mosaic.version = 11 : i64} {
  func.func @_ln_matmul_kernel(%arg0: i32, %arg1: i32, %arg2: memref<16x32xf32, #tpu.memory_space<vmem>>, %arg3: memref<1x32xf32, #tpu.memory_space<vmem>>, %arg4: memref<1x32xf32, #tpu.memory_space<vmem>>, %arg5: memref<32x96xbf16, #tpu.memory_space<vmem>>, %arg6: memref<1x96xf32, #tpu.memory_space<vmem>>, %arg7: memref<16x32xf32, #tpu.memory_space<vmem>>, %arg8: memref<16x96xbf16, #tpu.memory_space<vmem>>) attributes {dimension_semantics = [#tpu.dimension_semantics<parallel>, #tpu.dimension_semantics<arbitrary>], iteration_bounds = array<i64: 1, 1>, scalar_prefetch = 0 : i64, scratch_operands = 0 : i64, tpu.core_type = #tpu.core_type<tc>, window_params = [{transform_indices = @transform_0, window_bounds = array<i64: 16, 32>}, {pipeline_mode = #tpu.pipeline_mode<synchronous>, transform_indices = @transform_1, window_bounds = array<i64: 1, 32>}, {pipeline_mode = #tpu.pipeline_mode<synchronous>, transform_indices = @transform_2, window_bounds = array<i64: 1, 32>}, {transform_indices = @transform_3, window_bounds = array<i64: 32, 96>}, {transform_indices = @transform_4, window_bounds = array<i64: 1, 96>}, {transform_indices = @transform_5, window_bounds = array<i64: 16, 32>}, {transform_indices = @transform_6, window_bounds = array<i64: 16, 96>}]} {
    %c0 = arith.constant 0 : index
    %c0_0 = arith.constant 0 : index
    %0 = vector.load %arg2[%c0, %c0_0] : memref<16x32xf32, #tpu.memory_space<vmem>>, vector<16x32xf32>
    %c0_1 = arith.constant 0 : index
    %c0_2 = arith.constant 0 : index
    %1 = vector.load %arg3[%c0_1, %c0_2] : memref<1x32xf32, #tpu.memory_space<vmem>>, vector<1x32xf32>
    %c0_3 = arith.constant 0 : index
    %c0_4 = arith.constant 0 : index
    %2 = vector.load %arg4[%c0_3, %c0_4] : memref<1x32xf32, #tpu.memory_space<vmem>>, vector<1x32xf32>
    %cst = arith.constant dense<0.000000e+00> : vector<16xf32>
    %3 = vector.multi_reduction <add>, %0, %cst [1] : vector<16x32xf32> to vector<16xf32>
    %4 = vector.shape_cast %3 : vector<16xf32> to vector<16x1xf32>
    %cst_5 = arith.constant 3.200000e+01 : f32
    %5 = vector.broadcast %cst_5 : f32 to vector<16x1xf32>
    %6 = arith.divf %4, %5 : vector<16x1xf32>
    %7 = vector.broadcast %6 : vector<16x1xf32> to vector<16x32xf32>
    %8 = arith.subf %0, %7 : vector<16x32xf32>
    %9 = arith.mulf %8, %8 : vector<16x32xf32>
    %cst_6 = arith.constant dense<0.000000e+00> : vector<16xf32>
    %10 = vector.multi_reduction <add>, %9, %cst_6 [1] : vector<16x32xf32> to vector<16xf32>
    %11 = vector.shape_cast %10 : vector<16xf32> to vector<16x1xf32>
    %cst_7 = arith.constant 3.200000e+01 : f32
    %12 = vector.broadcast %cst_7 : f32 to vector<16x1xf32>
    %13 = arith.divf %11, %12 : vector<16x1xf32>
    %cst_8 = arith.constant 9.99999974E-6 : f32
    %14 = vector.broadcast %cst_8 : f32 to vector<16x1xf32>
    %15 = arith.addf %13, %14 : vector<16x1xf32>
    %16 = math.rsqrt %15 : vector<16x1xf32>
    %17 = vector.broadcast %16 : vector<16x1xf32> to vector<16x32xf32>
    %18 = arith.mulf %8, %17 : vector<16x32xf32>
    %19 = vector.broadcast %1 : vector<1x32xf32> to vector<16x32xf32>
    %20 = arith.mulf %18, %19 : vector<16x32xf32>
    %21 = vector.broadcast %2 : vector<1x32xf32> to vector<16x32xf32>
    %22 = arith.addf %20, %21 : vector<16x32xf32>
    %23 = arith.truncf %22 : vector<16x32xf32> to vector<16x32xbf16>
    %c0_9 = arith.constant 0 : index
    %c0_10 = arith.constant 0 : index
    %24 = vector.load %arg5[%c0_9, %c0_10] : memref<32x96xbf16, #tpu.memory_space<vmem>>, vector<32x96xbf16>
    %cst_11 = arith.constant dense<0.000000e+00> : vector<16x96xf32>
    %25 = tpu.matmul %23, %24, %cst_11 {dimension_numbers = #tpu.dot_dimension_numbers<[1], [0], [0], [1], [0, 0, 1, 1], [], []>} : vector<16x32xbf16>, vector<32x96xbf16>, vector<16x96xf32> -> vector<16x96xf32>
    %c0_12 = arith.constant 0 : index
    %c0_13 = arith.constant 0 : index
    %26 = vector.load %arg6[%c0_12, %c0_13] : memref<1x96xf32, #tpu.memory_space<vmem>>, vector<1x96xf32>
    %27 = vector.broadcast %26 : vector<1x96xf32> to vector<16x96xf32>
    %28 = arith.addf %25, %27 : vector<16x96xf32>
    %c0_i32 = arith.constant 0 : i32
    %29 = arith.cmpi eq, %arg1, %c0_i32 : i32
    %30 = arith.extui %29 : i1 to i32
    %c0_i32_14 = arith.constant 0 : i32
    %31 = arith.cmpi ne, %30, %c0_i32_14 : i32
    scf.if %31 {
      %c0_17 = arith.constant 0 : index
      %c0_18 = arith.constant 0 : index
      %34 = vector.load %arg7[%c0_17, %c0_18] : memref<16x32xf32, #tpu.memory_space<vmem>>, vector<16x32xf32>
      tpu.vector_store %arg7[%c0_17, %c0_18], %22 {strides = array<i32>} : memref<16x32xf32, #tpu.memory_space<vmem>>, vector<16x32xf32>,
    } else {
    }
    %32 = arith.truncf %28 : vector<16x96xf32> to vector<16x96xbf16>
    %c0_15 = arith.constant 0 : index
    %c0_16 = arith.constant 0 : index
    %33 = vector.load %arg8[%c0_15, %c0_16] : memref<16x96xbf16, #tpu.memory_space<vmem>>, vector<16x96xbf16>
    tpu.vector_store %arg8[%c0_15, %c0_16], %32 {strides = array<i32>} : memref<16x96xbf16, #tpu.memory_space<vmem>>, vector<16x96xbf16>,
    return
  }
  func.func @transform_0(%arg0: i32, %arg1: i32) -> (i32, i32) {
    %c0_i32 = arith.constant 0 : i32
    %c0_i32_0 = arith.constant 0 : i32
    return %arg0, %c0_i32 : i32, i32
  }
  func.func @transform_1(%arg0: i32, %arg1: i32) -> (i32, i32) {
    %c0_i32 = arith.constant 0 : i32
    %c0_i32_0 = arith.constant 0 : i32
    %c0_i32_1 = arith.constant 0 : i32
    return %c0_i32, %c0_i32_0 : i32, i32
  }
  func.func @transform_2(%arg0: i32, %arg1: i32) -> (i32, i32) {
    %c0_i32 = arith.constant 0 : i32
    %c0_i32_0 = arith.constant 0 : i32
    %c0_i32_1 = arith.constant 0 : i32
    return %c0_i32, %c0_i32_0 : i32, i32
  }
  func.func @transform_3(%arg0: i32, %arg1: i32) -> (i32, i32) {
    %c0_i32 = arith.constant 0 : i32
    %c0_i32_0 = arith.constant 0 : i32
    return %c0_i32, %arg1 : i32, i32
  }
  func.func @transform_4(%arg0: i32, %arg1: i32) -> (i32, i32) {
    %c0_i32 = arith.constant 0 : i32
    %c0_i32_0 = arith.constant 0 : i32
    return %c0_i32, %arg1 : i32, i32
  }
  func.func @transform_5(%arg0: i32, %arg1: i32) -> (i32, i32) {
    %c0_i32 = arith.constant 0 : i32
    %c0_i32_0 = arith.constant 0 : i32
    return %arg0, %c0_i32 : i32, i32
  }
  func.func @transform_6(%arg0: i32, %arg1: i32) -> (i32, i32) {
    %c0_i32 = arith.constant 0 : i32
    return %arg0, %arg1 : i32, i32
  }
}

module attributes {stable_mosaic.version = 11 : i64} {
  func.func @_attention_kernel(%arg0: i32, %arg1: i32, %arg2: memref<1x1x8x8xbf16, #tpu.memory_space<vmem>>, %arg3: memref<1x1x8x8xbf16, #tpu.memory_space<vmem>>, %arg4: memref<1x1x8x8xbf16, #tpu.memory_space<vmem>>, %arg5: memref<8x8xbf16, #tpu.memory_space<vmem>>, %arg6: memref<1x1x8x8xf32, #tpu.memory_space<vmem>>) attributes {dimension_semantics = [#tpu.dimension_semantics<parallel>, #tpu.dimension_semantics<parallel>], iteration_bounds = array<i64: 2, 4>, scalar_prefetch = 0 : i64, scratch_operands = 0 : i64, tpu.core_type = #tpu.core_type<tc>, window_params = [{transform_indices = @transform_0, window_bounds = array<i64: 1, 1, 8, 8>}, {transform_indices = @transform_1, window_bounds = array<i64: 1, 1, 8, 8>}, {transform_indices = @transform_2, window_bounds = array<i64: 1, 1, 8, 8>}, {pipeline_mode = #tpu.pipeline_mode<synchronous>, transform_indices = @transform_3, window_bounds = array<i64: 8, 8>}, {transform_indices = @transform_4, window_bounds = array<i64: 1, 1, 8, 8>}]} {
    %c0 = arith.constant 0 : index
    %c0_0 = arith.constant 0 : index
    %c0_1 = arith.constant 0 : index
    %c0_2 = arith.constant 0 : index
    %0 = vector.load %arg2[%c0, %c0_0, %c0_1, %c0_2] : memref<1x1x8x8xbf16, #tpu.memory_space<vmem>>, vector<1x1x8x8xbf16>
    %1 = vector.shape_cast %0 : vector<1x1x8x8xbf16> to vector<8x8xbf16>
    %c0_3 = arith.constant 0 : index
    %c0_4 = arith.constant 0 : index
    %c0_5 = arith.constant 0 : index
    %c0_6 = arith.constant 0 : index
    %2 = vector.load %arg3[%c0_3, %c0_4, %c0_5, %c0_6] : memref<1x1x8x8xbf16, #tpu.memory_space<vmem>>, vector<1x1x8x8xbf16>
    %3 = vector.shape_cast %2 : vector<1x1x8x8xbf16> to vector<8x8xbf16>
    %c0_7 = arith.constant 0 : index
    %c0_8 = arith.constant 0 : index
    %c0_9 = arith.constant 0 : index
    %c0_10 = arith.constant 0 : index
    %4 = vector.load %arg4[%c0_7, %c0_8, %c0_9, %c0_10] : memref<1x1x8x8xbf16, #tpu.memory_space<vmem>>, vector<1x1x8x8xbf16>
    %5 = vector.shape_cast %4 : vector<1x1x8x8xbf16> to vector<8x8xbf16>
    %c0_11 = arith.constant 0 : index
    %c0_12 = arith.constant 0 : index
    %6 = vector.load %arg5[%c0_11, %c0_12] : memref<8x8xbf16, #tpu.memory_space<vmem>>, vector<8x8xbf16>
    %7 = tpu.iota {dimensions = array<i32: 0>} : vector<8x8xi32>
    %8 = tpu.iota {dimensions = array<i32: 1>} : vector<8x8xi32>
    %9 = arith.cmpi sgt, %8, %7 : vector<8x8xi32>
    %c7_i32 = arith.constant 7 : i32
    %10 = vector.broadcast %c7_i32 : i32 to vector<8x8xi32>
    %11 = arith.subi %10, %7 : vector<8x8xi32>
    %cst = arith.constant dense<0.000000e+00> : vector<8x8xf32>
    %12 = tpu.matmul %1, %3, %cst {dimension_numbers = #tpu.dot_dimension_numbers<[1], [1], [0], [0], [0, 0, 1, 0], [], []>} : vector<8x8xbf16>, vector<8x8xbf16>, vector<8x8xf32> -> vector<8x8xf32>
    %cst_13 = arith.constant dense<0.000000e+00> : vector<8x8xf32>
    %13 = tpu.matmul %1, %6, %cst_13 {dimension_numbers = #tpu.dot_dimension_numbers<[1], [1], [0], [0], [0, 0, 1, 0], [], []>} : vector<8x8xbf16>, vector<8x8xbf16>, vector<8x8xf32> -> vector<8x8xf32>
    %14 = vector.extract_strided_slice %13 {offsets = [0, 1], sizes = [8, 7], strides = [1, 1]} : vector<8x8xf32> to vector<8x7xf32>
    %15 = vector.extract_strided_slice %13 {offsets = [0, 0], sizes = [8, 1], strides = [1, 1]} : vector<8x8xf32> to vector<8x1xf32>
    %16 = tpu.concatenate %14, %15 in 1 : vector<8x7xf32>, vector<8x1xf32> -> vector<8x8xf32>
    %c1_i32 = arith.constant 1 : i32
    %17 = vector.broadcast %c1_i32 : i32 to vector<8x8xi32>
    %18 = arith.andi %11, %17 : vector<8x8xi32>
    %c0_i32 = arith.constant 0 : i32
    %19 = vector.broadcast %c0_i32 : i32 to vector<8x8xi32>
    %20 = arith.cmpi ne, %18, %19 : vector<8x8xi32>
    %21 = arith.select %20, %16, %13 : vector<8x8xi1>, vector<8x8xf32>
    %22 = vector.extract_strided_slice %21 {offsets = [0, 2], sizes = [8, 6], strides = [1, 1]} : vector<8x8xf32> to vector<8x6xf32>
    %23 = vector.extract_strided_slice %21 {offsets = [0, 0], sizes = [8, 2], strides = [1, 1]} : vector<8x8xf32> to vector<8x2xf32>
    %24 = tpu.concatenate %22, %23 in 1 : vector<8x6xf32>, vector<8x2xf32> -> vector<8x8xf32>
    %c2_i32 = arith.constant 2 : i32
    %25 = vector.broadcast %c2_i32 : i32 to vector<8x8xi32>
    %26 = arith.andi %11, %25 : vector<8x8xi32>
    %c0_i32_14 = arith.constant 0 : i32
    %27 = vector.broadcast %c0_i32_14 : i32 to vector<8x8xi32>
    %28 = arith.cmpi ne, %26, %27 : vector<8x8xi32>
    %29 = arith.select %28, %24, %21 : vector<8x8xi1>, vector<8x8xf32>
    %30 = vector.extract_strided_slice %29 {offsets = [0, 4], sizes = [8, 4], strides = [1, 1]} : vector<8x8xf32> to vector<8x4xf32>
    %31 = vector.extract_strided_slice %29 {offsets = [0, 0], sizes = [8, 4], strides = [1, 1]} : vector<8x8xf32> to vector<8x4xf32>
    %32 = tpu.concatenate %30, %31 in 1 : vector<8x4xf32>, vector<8x4xf32> -> vector<8x8xf32>
    %c4_i32 = arith.constant 4 : i32
    %33 = vector.broadcast %c4_i32 : i32 to vector<8x8xi32>
    %34 = arith.andi %11, %33 : vector<8x8xi32>
    %c0_i32_15 = arith.constant 0 : i32
    %35 = vector.broadcast %c0_i32_15 : i32 to vector<8x8xi32>
    %36 = arith.cmpi ne, %34, %35 : vector<8x8xi32>
    %37 = arith.select %36, %32, %29 : vector<8x8xi1>, vector<8x8xf32>
    %38 = arith.addf %12, %37 : vector<8x8xf32>
    %cst_16 = arith.constant 0.353553385 : f32
    %39 = vector.broadcast %cst_16 : f32 to vector<8x8xf32>
    %40 = arith.mulf %38, %39 : vector<8x8xf32>
    %cst_17 = arith.constant 0xFF800000 : f32
    %41 = vector.broadcast %cst_17 : f32 to vector<8x8xf32>
    %42 = arith.select %9, %41, %40 : vector<8x8xi1>, vector<8x8xf32>
    %cst_18 = arith.constant dense<0xFF800000> : vector<8xf32>
    %43 = vector.multi_reduction <maximumf>, %42, %cst_18 [1] : vector<8x8xf32> to vector<8xf32>
    %44 = vector.shape_cast %43 : vector<8xf32> to vector<8x1xf32>
    %45 = vector.broadcast %44 : vector<8x1xf32> to vector<8x8xf32>
    %46 = arith.subf %42, %45 : vector<8x8xf32>
    %47 = math.exp %46 : vector<8x8xf32>
    %cst_19 = arith.constant dense<0.000000e+00> : vector<8xf32>
    %48 = vector.multi_reduction <add>, %47, %cst_19 [1] : vector<8x8xf32> to vector<8xf32>
    %49 = vector.shape_cast %48 : vector<8xf32> to vector<8x1xf32>
    %50 = vector.broadcast %49 : vector<8x1xf32> to vector<8x8xf32>
    %51 = arith.divf %47, %50 : vector<8x8xf32>
    %52 = arith.truncf %51 : vector<8x8xf32> to vector<8x8xbf16>
    %cst_20 = arith.constant dense<0.000000e+00> : vector<8x8xf32>
    %53 = tpu.matmul %52, %5, %cst_20 {dimension_numbers = #tpu.dot_dimension_numbers<[1], [0], [0], [1], [0, 0, 1, 1], [], []>} : vector<8x8xbf16>, vector<8x8xbf16>, vector<8x8xf32> -> vector<8x8xf32>
    %c0_21 = arith.constant 0 : index
    %c0_22 = arith.constant 0 : index
    %c0_23 = arith.constant 0 : index
    %c0_24 = arith.constant 0 : index
    %54 = vector.load %arg6[%c0_21, %c0_22, %c0_23, %c0_24] : memref<1x1x8x8xf32, #tpu.memory_space<vmem>>, vector<1x1x8x8xf32>
    %55 = vector.shape_cast %54 : vector<1x1x8x8xf32> to vector<8x8xf32>
    %56 = vector.shape_cast %53 : vector<8x8xf32> to vector<1x1x8x8xf32>
    tpu.vector_store %arg6[%c0_21, %c0_22, %c0_23, %c0_24], %56 {strides = array<i32>} : memref<1x1x8x8xf32, #tpu.memory_space<vmem>>, vector<1x1x8x8xf32>,
    return
  }
  func.func @transform_0(%arg0: i32, %arg1: i32) -> (i32, i32, i32, i32) {
    %c0_i32 = arith.constant 0 : i32
    %c0_i32_0 = arith.constant 0 : i32
    %c0_i32_1 = arith.constant 0 : i32
    return %arg0, %arg1, %c0_i32, %c0_i32_0 : i32, i32, i32, i32
  }
  func.func @transform_1(%arg0: i32, %arg1: i32) -> (i32, i32, i32, i32) {
    %c0_i32 = arith.constant 0 : i32
    %c0_i32_0 = arith.constant 0 : i32
    %c0_i32_1 = arith.constant 0 : i32
    return %arg0, %arg1, %c0_i32, %c0_i32_0 : i32, i32, i32, i32
  }
  func.func @transform_2(%arg0: i32, %arg1: i32) -> (i32, i32, i32, i32) {
    %c0_i32 = arith.constant 0 : i32
    %c0_i32_0 = arith.constant 0 : i32
    %c0_i32_1 = arith.constant 0 : i32
    return %arg0, %arg1, %c0_i32, %c0_i32_0 : i32, i32, i32, i32
  }
  func.func @transform_3(%arg0: i32, %arg1: i32) -> (i32, i32) {
    %c0_i32 = arith.constant 0 : i32
    %c0_i32_0 = arith.constant 0 : i32
    %c0_i32_1 = arith.constant 0 : i32
    return %c0_i32, %c0_i32_0 : i32, i32
  }
  func.func @transform_4(%arg0: i32, %arg1: i32) -> (i32, i32, i32, i32) {
    %c0_i32 = arith.constant 0 : i32
    %c0_i32_0 = arith.constant 0 : i32
    %c0_i32_1 = arith.constant 0 : i32
    return %arg0, %arg1, %c0_i32, %c0_i32_0 : i32, i32, i32, i32
  }
}

module attributes {stable_mosaic.version = 11 : i64} {
  func.func @_ln_matmul_kernel(%arg0: i32, %arg1: i32, %arg2: memref<16x32xf32, #tpu.memory_space<vmem>>, %arg3: memref<16x32xf32, #tpu.memory_space<vmem>>, %arg4: memref<1x32xf32, #tpu.memory_space<vmem>>, %arg5: memref<1x32xf32, #tpu.memory_space<vmem>>, %arg6: memref<32x64xbf16, #tpu.memory_space<vmem>>, %arg7: memref<1x64xf32, #tpu.memory_space<vmem>>, %arg8: memref<16x32xf32, #tpu.memory_space<vmem>>, %arg9: memref<16x64xbf16, #tpu.memory_space<vmem>>) attributes {dimension_semantics = [#tpu.dimension_semantics<parallel>, #tpu.dimension_semantics<arbitrary>], iteration_bounds = array<i64: 1, 1>, scalar_prefetch = 0 : i64, scratch_operands = 0 : i64, tpu.core_type = #tpu.core_type<tc>, window_params = [{transform_indices = @transform_0, window_bounds = array<i64: 16, 32>}, {transform_indices = @transform_1, window_bounds = array<i64: 16, 32>}, {pipeline_mode = #tpu.pipeline_mode<synchronous>, transform_indices = @transform_2, window_bounds = array<i64: 1, 32>}, {pipeline_mode = #tpu.pipeline_mode<synchronous>, transform_indices = @transform_3, window_bounds = array<i64: 1, 32>}, {transform_indices = @transform_4, window_bounds = array<i64: 32, 64>}, {transform_indices = @transform_5, window_bounds = array<i64: 1, 64>}, {transform_indices = @transform_6, window_bounds = array<i64: 16, 32>}, {transform_indices = @transform_7, window_bounds = array<i64: 16, 64>}]} {
    %c0 = arith.constant 0 : index
    %c0_0 = arith.constant 0 : index
    %0 = vector.load %arg2[%c0, %c0_0] : memref<16x32xf32, #tpu.memory_space<vmem>>, vector<16x32xf32>
    %c0_1 = arith.constant 0 : index
    %c0_2 = arith.constant 0 : index
    %1 = vector.load %arg3[%c0_1, %c0_2] : memref<16x32xf32, #tpu.memory_space<vmem>>, vector<16x32xf32>
    %2 = arith.addf %0, %1 : vector<16x32xf32>
    %c0_3 = arith.constant 0 : index
    %c0_4 = arith.constant 0 : index
    %3 = vector.load %arg4[%c0_3, %c0_4] : memref<1x32xf32, #tpu.memory_space<vmem>>, vector<1x32xf32>
    %c0_5 = arith.constant 0 : index
    %c0_6 = arith.constant 0 : index
    %4 = vector.load %arg5[%c0_5, %c0_6] : memref<1x32xf32, #tpu.memory_space<vmem>>, vector<1x32xf32>
    %cst = arith.constant dense<0.000000e+00> : vector<16xf32>
    %5 = vector.multi_reduction <add>, %2, %cst [1] : vector<16x32xf32> to vector<16xf32>
    %6 = vector.shape_cast %5 : vector<16xf32> to vector<16x1xf32>
    %cst_7 = arith.constant 3.200000e+01 : f32
    %7 = vector.broadcast %cst_7 : f32 to vector<16x1xf32>
    %8 = arith.divf %6, %7 : vector<16x1xf32>
    %9 = vector.broadcast %8 : vector<16x1xf32> to vector<16x32xf32>
    %10 = arith.subf %2, %9 : vector<16x32xf32>
    %11 = arith.mulf %10, %10 : vector<16x32xf32>
    %cst_8 = arith.constant dense<0.000000e+00> : vector<16xf32>
    %12 = vector.multi_reduction <add>, %11, %cst_8 [1] : vector<16x32xf32> to vector<16xf32>
    %13 = vector.shape_cast %12 : vector<16xf32> to vector<16x1xf32>
    %cst_9 = arith.constant 3.200000e+01 : f32
    %14 = vector.broadcast %cst_9 : f32 to vector<16x1xf32>
    %15 = arith.divf %13, %14 : vector<16x1xf32>
    %cst_10 = arith.constant 9.99999974E-6 : f32
    %16 = vector.broadcast %cst_10 : f32 to vector<16x1xf32>
    %17 = arith.addf %15, %16 : vector<16x1xf32>
    %18 = math.rsqrt %17 : vector<16x1xf32>
    %19 = vector.broadcast %18 : vector<16x1xf32> to vector<16x32xf32>
    %20 = arith.mulf %10, %19 : vector<16x32xf32>
    %21 = vector.broadcast %3 : vector<1x32xf32> to vector<16x32xf32>
    %22 = arith.mulf %20, %21 : vector<16x32xf32>
    %23 = vector.broadcast %4 : vector<1x32xf32> to vector<16x32xf32>
    %24 = arith.addf %22, %23 : vector<16x32xf32>
    %25 = arith.truncf %24 : vector<16x32xf32> to vector<16x32xbf16>
    %c0_11 = arith.constant 0 : index
    %c0_12 = arith.constant 0 : index
    %26 = vector.load %arg6[%c0_11, %c0_12] : memref<32x64xbf16, #tpu.memory_space<vmem>>, vector<32x64xbf16>
    %cst_13 = arith.constant dense<0.000000e+00> : vector<16x64xf32>
    %27 = tpu.matmul %25, %26, %cst_13 {dimension_numbers = #tpu.dot_dimension_numbers<[1], [0], [0], [1], [0, 0, 1, 1], [], []>} : vector<16x32xbf16>, vector<32x64xbf16>, vector<16x64xf32> -> vector<16x64xf32>
    %c0_14 = arith.constant 0 : index
    %c0_15 = arith.constant 0 : index
    %28 = vector.load %arg7[%c0_14, %c0_15] : memref<1x64xf32, #tpu.memory_space<vmem>>, vector<1x64xf32>
    %29 = vector.broadcast %28 : vector<1x64xf32> to vector<16x64xf32>
    %30 = arith.addf %27, %29 : vector<16x64xf32>
    %cst_16 = arith.constant 0.000000e+00 : f32
    %31 = vector.broadcast %cst_16 : f32 to vector<16x64xf32>
    %32 = arith.maximumf %30, %31 : vector<16x64xf32>
    %c0_i32 = arith.constant 0 : i32
    %33 = arith.cmpi eq, %arg1, %c0_i32 : i32
    %34 = arith.extui %33 : i1 to i32
    %c0_i32_17 = arith.constant 0 : i32
    %35 = arith.cmpi ne, %34, %c0_i32_17 : i32
    scf.if %35 {
      %c0_20 = arith.constant 0 : index
      %c0_21 = arith.constant 0 : index
      %38 = vector.load %arg8[%c0_20, %c0_21] : memref<16x32xf32, #tpu.memory_space<vmem>>, vector<16x32xf32>
      tpu.vector_store %arg8[%c0_20, %c0_21], %24 {strides = array<i32>} : memref<16x32xf32, #tpu.memory_space<vmem>>, vector<16x32xf32>,
    } else {
    }
    %36 = arith.truncf %32 : vector<16x64xf32> to vector<16x64xbf16>
    %c0_18 = arith.constant 0 : index
    %c0_19 = arith.constant 0 : index
    %37 = vector.load %arg9[%c0_18, %c0_19] : memref<16x64xbf16, #tpu.memory_space<vmem>>, vector<16x64xbf16>
    tpu.vector_store %arg9[%c0_18, %c0_19], %36 {strides = array<i32>} : memref<16x64xbf16, #tpu.memory_space<vmem>>, vector<16x64xbf16>,
    return
  }
  func.func @transform_0(%arg0: i32, %arg1: i32) -> (i32, i32) {
    %c0_i32 = arith.constant 0 : i32
    %c0_i32_0 = arith.constant 0 : i32
    return %arg0, %c0_i32 : i32, i32
  }
  func.func @transform_1(%arg0: i32, %arg1: i32) -> (i32, i32) {
    %c0_i32 = arith.constant 0 : i32
    %c0_i32_0 = arith.constant 0 : i32
    return %arg0, %c0_i32 : i32, i32
  }
  func.func @transform_2(%arg0: i32, %arg1: i32) -> (i32, i32) {
    %c0_i32 = arith.constant 0 : i32
    %c0_i32_0 = arith.constant 0 : i32
    %c0_i32_1 = arith.constant 0 : i32
    return %c0_i32, %c0_i32_0 : i32, i32
  }
  func.func @transform_3(%arg0: i32, %arg1: i32) -> (i32, i32) {
    %c0_i32 = arith.constant 0 : i32
    %c0_i32_0 = arith.constant 0 : i32
    %c0_i32_1 = arith.constant 0 : i32
    return %c0_i32, %c0_i32_0 : i32, i32
  }
  func.func @transform_4(%arg0: i32, %arg1: i32) -> (i32, i32) {
    %c0_i32 = arith.constant 0 : i32
    %c0_i32_0 = arith.constant 0 : i32
    return %c0_i32, %arg1 : i32, i32
  }
  func.func @transform_5(%arg0: i32, %arg1: i32) -> (i32, i32) {
    %c0_i32 = arith.constant 0 : i32
    %c0_i32_0 = arith.constant 0 : i32
    return %c0_i32, %arg1 : i32, i32
  }
  func.func @transform_6(%arg0: i32, %arg1: i32) -> (i32, i32) {
    %c0_i32 = arith.constant 0 : i32
    %c0_i32_0 = arith.constant 0 : i32
    return %arg0, %c0_i32 : i32, i32
  }
  func.func @transform_7(%arg0: i32, %arg1: i32) -> (i32, i32) {
    %c0_i32 = arith.constant 0 : i32
    return %arg0, %arg1 : i32, i32
  }
}

module attributes {stable_mosaic.version = 11 : i64} {
  func.func @_matmul_res_kernel(%arg0: i32, %arg1: i32, %arg2: memref<16x64xbf16, #tpu.memory_space<vmem>>, %arg3: memref<16x32xf32, #tpu.memory_space<vmem>>, %arg4: memref<64x32xbf16, #tpu.memory_space<vmem>>, %arg5: memref<1x32xf32, #tpu.memory_space<vmem>>, %arg6: memref<16x32xf32, #tpu.memory_space<vmem>>) attributes {dimension_semantics = [#tpu.dimension_semantics<parallel>, #tpu.dimension_semantics<parallel>], iteration_bounds = array<i64: 1, 1>, scalar_prefetch = 0 : i64, scratch_operands = 0 : i64, tpu.core_type = #tpu.core_type<tc>, window_params = [{transform_indices = @transform_0, window_bounds = array<i64: 16, 64>}, {transform_indices = @transform_1, window_bounds = array<i64: 16, 32>}, {transform_indices = @transform_2, window_bounds = array<i64: 64, 32>}, {transform_indices = @transform_3, window_bounds = array<i64: 1, 32>}, {transform_indices = @transform_4, window_bounds = array<i64: 16, 32>}]} {
    %c0 = arith.constant 0 : index
    %c0_0 = arith.constant 0 : index
    %0 = vector.load %arg3[%c0, %c0_0] : memref<16x32xf32, #tpu.memory_space<vmem>>, vector<16x32xf32>
    %c0_1 = arith.constant 0 : index
    %c0_2 = arith.constant 0 : index
    %1 = vector.load %arg5[%c0_1, %c0_2] : memref<1x32xf32, #tpu.memory_space<vmem>>, vector<1x32xf32>
    %2 = vector.broadcast %1 : vector<1x32xf32> to vector<16x32xf32>
    %3 = arith.addf %0, %2 : vector<16x32xf32>
    %c0_3 = arith.constant 0 : index
    %c0_4 = arith.constant 0 : index
    %4 = vector.load %arg2[%c0_3, %c0_4] : memref<16x64xbf16, #tpu.memory_space<vmem>>, vector<16x64xbf16>
    %c0_5 = arith.constant 0 : index
    %c0_6 = arith.constant 0 : index
    %5 = vector.load %arg4[%c0_5, %c0_6] : memref<64x32xbf16, #tpu.memory_space<vmem>>, vector<64x32xbf16>
    %cst = arith.constant dense<0.000000e+00> : vector<16x32xf32>
    %6 = tpu.matmul %4, %5, %cst {dimension_numbers = #tpu.dot_dimension_numbers<[1], [0], [0], [1], [0, 0, 1, 1], [], []>} : vector<16x64xbf16>, vector<64x32xbf16>, vector<16x32xf32> -> vector<16x32xf32>
    %7 = arith.addf %3, %6 : vector<16x32xf32>
    %c0_7 = arith.constant 0 : index
    %c0_8 = arith.constant 0 : index
    %8 = vector.load %arg6[%c0_7, %c0_8] : memref<16x32xf32, #tpu.memory_space<vmem>>, vector<16x32xf32>
    tpu.vector_store %arg6[%c0_7, %c0_8], %7 {strides = array<i32>} : memref<16x32xf32, #tpu.memory_space<vmem>>, vector<16x32xf32>,
    return
  }
  func.func @transform_0(%arg0: i32, %arg1: i32) -> (i32, i32) {
    %c0_i32 = arith.constant 0 : i32
    %c0_i32_0 = arith.constant 0 : i32
    return %arg0, %c0_i32 : i32, i32
  }
  func.func @transform_1(%arg0: i32, %arg1: i32) -> (i32, i32) {
    %c0_i32 = arith.constant 0 : i32
    return %arg0, %arg1 : i32, i32
  }
  func.func @transform_2(%arg0: i32, %arg1: i32) -> (i32, i32) {
    %c0_i32 = arith.constant 0 : i32
    %c0_i32_0 = arith.constant 0 : i32
    return %c0_i32, %arg1 : i32, i32
  }
  func.func @transform_3(%arg0: i32, %arg1: i32) -> (i32, i32) {
    %c0_i32 = arith.constant 0 : i32
    %c0_i32_0 = arith.constant 0 : i32
    return %c0_i32, %arg1 : i32, i32
  }
  func.func @transform_4(%arg0: i32, %arg1: i32) -> (i32, i32) {
    %c0_i32 = arith.constant 0 : i32
    return %arg0, %arg1 : i32, i32
  }
}

module attributes {stable_mosaic.version = 11 : i64} {
  func.func @_gen_out_kernel(%arg0: i32, %arg1: i32, %arg2: memref<16x32xf32, #tpu.memory_space<vmem>>, %arg3: memref<1x32xf32, #tpu.memory_space<vmem>>, %arg4: memref<1x32xf32, #tpu.memory_space<vmem>>, %arg5: memref<32x11xbf16, #tpu.memory_space<vmem>>, %arg6: memref<1x11xf32, #tpu.memory_space<vmem>>, %arg7: memref<16x1xf32, #tpu.memory_space<vmem>>, %arg8: memref<16x11xf32, #tpu.memory_space<vmem>>) attributes {dimension_semantics = [#tpu.dimension_semantics<parallel>, #tpu.dimension_semantics<parallel>], iteration_bounds = array<i64: 1, 1>, scalar_prefetch = 0 : i64, scratch_operands = 0 : i64, tpu.core_type = #tpu.core_type<tc>, window_params = [{transform_indices = @transform_0, window_bounds = array<i64: 16, 32>}, {pipeline_mode = #tpu.pipeline_mode<synchronous>, transform_indices = @transform_1, window_bounds = array<i64: 1, 32>}, {pipeline_mode = #tpu.pipeline_mode<synchronous>, transform_indices = @transform_2, window_bounds = array<i64: 1, 32>}, {transform_indices = @transform_3, window_bounds = array<i64: 32, 11>}, {transform_indices = @transform_4, window_bounds = array<i64: 1, 11>}, {transform_indices = @transform_5, window_bounds = array<i64: 16, 1>}, {transform_indices = @transform_6, window_bounds = array<i64: 16, 11>}]} {
    %c0 = arith.constant 0 : index
    %c0_0 = arith.constant 0 : index
    %0 = vector.load %arg2[%c0, %c0_0] : memref<16x32xf32, #tpu.memory_space<vmem>>, vector<16x32xf32>
    %c0_1 = arith.constant 0 : index
    %c0_2 = arith.constant 0 : index
    %1 = vector.load %arg3[%c0_1, %c0_2] : memref<1x32xf32, #tpu.memory_space<vmem>>, vector<1x32xf32>
    %c0_3 = arith.constant 0 : index
    %c0_4 = arith.constant 0 : index
    %2 = vector.load %arg4[%c0_3, %c0_4] : memref<1x32xf32, #tpu.memory_space<vmem>>, vector<1x32xf32>
    %cst = arith.constant dense<0.000000e+00> : vector<16xf32>
    %3 = vector.multi_reduction <add>, %0, %cst [1] : vector<16x32xf32> to vector<16xf32>
    %4 = vector.shape_cast %3 : vector<16xf32> to vector<16x1xf32>
    %cst_5 = arith.constant 3.200000e+01 : f32
    %5 = vector.broadcast %cst_5 : f32 to vector<16x1xf32>
    %6 = arith.divf %4, %5 : vector<16x1xf32>
    %7 = vector.broadcast %6 : vector<16x1xf32> to vector<16x32xf32>
    %8 = arith.subf %0, %7 : vector<16x32xf32>
    %9 = arith.mulf %8, %8 : vector<16x32xf32>
    %cst_6 = arith.constant dense<0.000000e+00> : vector<16xf32>
    %10 = vector.multi_reduction <add>, %9, %cst_6 [1] : vector<16x32xf32> to vector<16xf32>
    %11 = vector.shape_cast %10 : vector<16xf32> to vector<16x1xf32>
    %cst_7 = arith.constant 3.200000e+01 : f32
    %12 = vector.broadcast %cst_7 : f32 to vector<16x1xf32>
    %13 = arith.divf %11, %12 : vector<16x1xf32>
    %cst_8 = arith.constant 9.99999974E-6 : f32
    %14 = vector.broadcast %cst_8 : f32 to vector<16x1xf32>
    %15 = arith.addf %13, %14 : vector<16x1xf32>
    %16 = math.rsqrt %15 : vector<16x1xf32>
    %17 = vector.broadcast %16 : vector<16x1xf32> to vector<16x32xf32>
    %18 = arith.mulf %8, %17 : vector<16x32xf32>
    %19 = vector.broadcast %1 : vector<1x32xf32> to vector<16x32xf32>
    %20 = arith.mulf %18, %19 : vector<16x32xf32>
    %21 = vector.broadcast %2 : vector<1x32xf32> to vector<16x32xf32>
    %22 = arith.addf %20, %21 : vector<16x32xf32>
    %23 = arith.truncf %22 : vector<16x32xf32> to vector<16x32xbf16>
    %c0_9 = arith.constant 0 : index
    %c0_10 = arith.constant 0 : index
    %24 = vector.load %arg5[%c0_9, %c0_10] : memref<32x11xbf16, #tpu.memory_space<vmem>>, vector<32x11xbf16>
    %cst_11 = arith.constant dense<0.000000e+00> : vector<16x11xf32>
    %25 = tpu.matmul %23, %24, %cst_11 {dimension_numbers = #tpu.dot_dimension_numbers<[1], [0], [0], [1], [0, 0, 1, 1], [], []>} : vector<16x32xbf16>, vector<32x11xbf16>, vector<16x11xf32> -> vector<16x11xf32>
    %c0_12 = arith.constant 0 : index
    %c0_13 = arith.constant 0 : index
    %26 = vector.load %arg6[%c0_12, %c0_13] : memref<1x11xf32, #tpu.memory_space<vmem>>, vector<1x11xf32>
    %27 = vector.broadcast %26 : vector<1x11xf32> to vector<16x11xf32>
    %28 = arith.addf %25, %27 : vector<16x11xf32>
    %c0_14 = arith.constant 0 : index
    %c0_15 = arith.constant 0 : index
    %29 = vector.load %arg7[%c0_14, %c0_15] : memref<16x1xf32, #tpu.memory_space<vmem>>, vector<16x1xf32>
    %30 = vector.broadcast %29 : vector<16x1xf32> to vector<16x11xf32>
    %31 = arith.subf %28, %30 : vector<16x11xf32>
    %c0_16 = arith.constant 0 : index
    %c0_17 = arith.constant 0 : index
    %32 = vector.load %arg8[%c0_16, %c0_17] : memref<16x11xf32, #tpu.memory_space<vmem>>, vector<16x11xf32>
    tpu.vector_store %arg8[%c0_16, %c0_17], %31 {strides = array<i32>} : memref<16x11xf32, #tpu.memory_space<vmem>>, vector<16x11xf32>,
    return
  }
  func.func @transform_0(%arg0: i32, %arg1: i32) -> (i32, i32) {
    %c0_i32 = arith.constant 0 : i32
    %c0_i32_0 = arith.constant 0 : i32
    return %arg0, %c0_i32 : i32, i32
  }
  func.func @transform_1(%arg0: i32, %arg1: i32) -> (i32, i32) {
    %c0_i32 = arith.constant 0 : i32
    %c0_i32_0 = arith.constant 0 : i32
    %c0_i32_1 = arith.constant 0 : i32
    return %c0_i32, %c0_i32_0 : i32, i32
  }
  func.func @transform_2(%arg0: i32, %arg1: i32) -> (i32, i32) {
    %c0_i32 = arith.constant 0 : i32
    %c0_i32_0 = arith.constant 0 : i32
    %c0_i32_1 = arith.constant 0 : i32
    return %c0_i32, %c0_i32_0 : i32, i32
  }
  func.func @transform_3(%arg0: i32, %arg1: i32) -> (i32, i32) {
    %c0_i32 = arith.constant 0 : i32
    %c0_i32_0 = arith.constant 0 : i32
    return %c0_i32, %arg1 : i32, i32
  }
  func.func @transform_4(%arg0: i32, %arg1: i32) -> (i32, i32) {
    %c0_i32 = arith.constant 0 : i32
    %c0_i32_0 = arith.constant 0 : i32
    return %c0_i32, %arg1 : i32, i32
  }
  func.func @transform_5(%arg0: i32, %arg1: i32) -> (i32, i32) {
    %c0_i32 = arith.constant 0 : i32
    %c0_i32_0 = arith.constant 0 : i32
    return %arg0, %c0_i32 : i32, i32
  }
  func.func @transform_6(%arg0: i32, %arg1: i32) -> (i32, i32) {
    %c0_i32 = arith.constant 0 : i32
    return %arg0, %arg1 : i32, i32
  }
}

module attributes {stable_mosaic.version = 11 : i64} {
  func.func @_gen_lse_kernel(%arg0: i32, %arg1: i32, %arg2: memref<16x32xf32, #tpu.memory_space<vmem>>, %arg3: memref<1x32xf32, #tpu.memory_space<vmem>>, %arg4: memref<1x32xf32, #tpu.memory_space<vmem>>, %arg5: memref<32x11xbf16, #tpu.memory_space<vmem>>, %arg6: memref<1x11xf32, #tpu.memory_space<vmem>>, %arg7: memref<16x1xf32, #tpu.memory_space<vmem>>, %arg8: memref<16x1xf32, #tpu.memory_space<vmem>>, %arg9: memref<16x1xf32, #tpu.memory_space<vmem>>) attributes {dimension_semantics = [#tpu.dimension_semantics<parallel>, #tpu.dimension_semantics<arbitrary>], iteration_bounds = array<i64: 1, 1>, scalar_prefetch = 0 : i64, scratch_operands = 2 : i64, tpu.core_type = #tpu.core_type<tc>, window_params = [{transform_indices = @transform_0, window_bounds = array<i64: 16, 32>}, {pipeline_mode = #tpu.pipeline_mode<synchronous>, transform_indices = @transform_1, window_bounds = array<i64: 1, 32>}, {pipeline_mode = #tpu.pipeline_mode<synchronous>, transform_indices = @transform_2, window_bounds = array<i64: 1, 32>}, {transform_indices = @transform_3, window_bounds = array<i64: 32, 11>}, {transform_indices = @transform_4, window_bounds = array<i64: 1, 11>}, {transform_indices = @transform_5, window_bounds = array<i64: 16, 1>}]} {
    %c0_i32 = arith.constant 0 : i32
    %0 = arith.cmpi eq, %arg1, %c0_i32 : i32
    %1 = arith.extui %0 : i1 to i32
    %c0_i32_0 = arith.constant 0 : i32
    %2 = arith.cmpi ne, %1, %c0_i32_0 : i32
    scf.if %2 {
      %cst_27 = arith.constant 0xFF800000 : f32
      %51 = vector.broadcast %cst_27 : f32 to vector<16x1xf32>
      %c0_28 = arith.constant 0 : index
      %c0_29 = arith.constant 0 : index
      %52 = vector.load %arg8[%c0_28, %c0_29] : memref<16x1xf32, #tpu.memory_space<vmem>>, vector<16x1xf32>
      tpu.vector_store %arg8[%c0_28, %c0_29], %51 {strides = array<i32>} : memref<16x1xf32, #tpu.memory_space<vmem>>, vector<16x1xf32>,
      %cst_30 = arith.constant 0.000000e+00 : f32
      %53 = vector.broadcast %cst_30 : f32 to vector<16x1xf32>
      %c0_31 = arith.constant 0 : index
      %c0_32 = arith.constant 0 : index
      %54 = vector.load %arg9[%c0_31, %c0_32] : memref<16x1xf32, #tpu.memory_space<vmem>>, vector<16x1xf32>
      tpu.vector_store %arg9[%c0_31, %c0_32], %53 {strides = array<i32>} : memref<16x1xf32, #tpu.memory_space<vmem>>, vector<16x1xf32>,
    } else {
    }
    %c0 = arith.constant 0 : index
    %c0_1 = arith.constant 0 : index
    %3 = vector.load %arg2[%c0, %c0_1] : memref<16x32xf32, #tpu.memory_space<vmem>>, vector<16x32xf32>
    %c0_2 = arith.constant 0 : index
    %c0_3 = arith.constant 0 : index
    %4 = vector.load %arg3[%c0_2, %c0_3] : memref<1x32xf32, #tpu.memory_space<vmem>>, vector<1x32xf32>
    %c0_4 = arith.constant 0 : index
    %c0_5 = arith.constant 0 : index
    %5 = vector.load %arg4[%c0_4, %c0_5] : memref<1x32xf32, #tpu.memory_space<vmem>>, vector<1x32xf32>
    %cst = arith.constant dense<0.000000e+00> : vector<16xf32>
    %6 = vector.multi_reduction <add>, %3, %cst [1] : vector<16x32xf32> to vector<16xf32>
    %7 = vector.shape_cast %6 : vector<16xf32> to vector<16x1xf32>
    %cst_6 = arith.constant 3.200000e+01 : f32
    %8 = vector.broadcast %cst_6 : f32 to vector<16x1xf32>
    %9 = arith.divf %7, %8 : vector<16x1xf32>
    %10 = vector.broadcast %9 : vector<16x1xf32> to vector<16x32xf32>
    %11 = arith.subf %3, %10 : vector<16x32xf32>
    %12 = arith.mulf %11, %11 : vector<16x32xf32>
    %cst_7 = arith.constant dense<0.000000e+00> : vector<16xf32>
    %13 = vector.multi_reduction <add>, %12, %cst_7 [1] : vector<16x32xf32> to vector<16xf32>
    %14 = vector.shape_cast %13 : vector<16xf32> to vector<16x1xf32>
    %cst_8 = arith.constant 3.200000e+01 : f32
    %15 = vector.broadcast %cst_8 : f32 to vector<16x1xf32>
    %16 = arith.divf %14, %15 : vector<16x1xf32>
    %cst_9 = arith.constant 9.99999974E-6 : f32
    %17 = vector.broadcast %cst_9 : f32 to vector<16x1xf32>
    %18 = arith.addf %16, %17 : vector<16x1xf32>
    %19 = math.rsqrt %18 : vector<16x1xf32>
    %20 = vector.broadcast %19 : vector<16x1xf32> to vector<16x32xf32>
    %21 = arith.mulf %11, %20 : vector<16x32xf32>
    %22 = vector.broadcast %4 : vector<1x32xf32> to vector<16x32xf32>
    %23 = arith.mulf %21, %22 : vector<16x32xf32>
    %24 = vector.broadcast %5 : vector<1x32xf32> to vector<16x32xf32>
    %25 = arith.addf %23, %24 : vector<16x32xf32>
    %26 = arith.truncf %25 : vector<16x32xf32> to vector<16x32xbf16>
    %c0_10 = arith.constant 0 : index
    %c0_11 = arith.constant 0 : index
    %27 = vector.load %arg5[%c0_10, %c0_11] : memref<32x11xbf16, #tpu.memory_space<vmem>>, vector<32x11xbf16>
    %cst_12 = arith.constant dense<0.000000e+00> : vector<16x11xf32>
    %28 = tpu.matmul %26, %27, %cst_12 {dimension_numbers = #tpu.dot_dimension_numbers<[1], [0], [0], [1], [0, 0, 1, 1], [], []>} : vector<16x32xbf16>, vector<32x11xbf16>, vector<16x11xf32> -> vector<16x11xf32>
    %c0_13 = arith.constant 0 : index
    %c0_14 = arith.constant 0 : index
    %29 = vector.load %arg6[%c0_13, %c0_14] : memref<1x11xf32, #tpu.memory_space<vmem>>, vector<1x11xf32>
    %30 = vector.broadcast %29 : vector<1x11xf32> to vector<16x11xf32>
    %31 = arith.addf %28, %30 : vector<16x11xf32>
    %c0_15 = arith.constant 0 : index
    %c0_16 = arith.constant 0 : index
    %32 = vector.load %arg8[%c0_15, %c0_16] : memref<16x1xf32, #tpu.memory_space<vmem>>, vector<16x1xf32>
    %cst_17 = arith.constant dense<0xFF800000> : vector<16xf32>
    %33 = vector.multi_reduction <maximumf>, %31, %cst_17 [1] : vector<16x11xf32> to vector<16xf32>
    %34 = vector.shape_cast %33 : vector<16xf32> to vector<16x1xf32>
    %35 = arith.maximumf %32, %34 : vector<16x1xf32>
    %c0_18 = arith.constant 0 : index
    %c0_19 = arith.constant 0 : index
    %36 = vector.load %arg9[%c0_18, %c0_19] : memref<16x1xf32, #tpu.memory_space<vmem>>, vector<16x1xf32>
    %37 = arith.subf %32, %35 : vector<16x1xf32>
    %38 = math.exp %37 : vector<16x1xf32>
    %39 = arith.mulf %36, %38 : vector<16x1xf32>
    %40 = vector.broadcast %35 : vector<16x1xf32> to vector<16x11xf32>
    %41 = arith.subf %31, %40 : vector<16x11xf32>
    %42 = math.exp %41 : vector<16x11xf32>
    %cst_20 = arith.constant dense<0.000000e+00> : vector<16xf32>
    %43 = vector.multi_reduction <add>, %42, %cst_20 [1] : vector<16x11xf32> to vector<16xf32>
    %44 = vector.shape_cast %43 : vector<16xf32> to vector<16x1xf32>
    %45 = arith.addf %39, %44 : vector<16x1xf32>
    %c0_21 = arith.constant 0 : index
    %c0_22 = arith.constant 0 : index
    %46 = vector.load %arg9[%c0_21, %c0_22] : memref<16x1xf32, #tpu.memory_space<vmem>>, vector<16x1xf32>
    tpu.vector_store %arg9[%c0_21, %c0_22], %45 {strides = array<i32>} : memref<16x1xf32, #tpu.memory_space<vmem>>, vector<16x1xf32>,
    %c0_23 = arith.constant 0 : index
    %c0_24 = arith.constant 0 : index
    %47 = vector.load %arg8[%c0_23, %c0_24] : memref<16x1xf32, #tpu.memory_space<vmem>>, vector<16x1xf32>
    tpu.vector_store %arg8[%c0_23, %c0_24], %35 {strides = array<i32>} : memref<16x1xf32, #tpu.memory_space<vmem>>, vector<16x1xf32>,
    %c0_i32_25 = arith.constant 0 : i32
    %48 = arith.cmpi eq, %arg1, %c0_i32_25 : i32
    %49 = arith.extui %48 : i1 to i32
    %c0_i32_26 = arith.constant 0 : i32
    %50 = arith.cmpi ne, %49, %c0_i32_26 : i32
    scf.if %50 {
      %c0_27 = arith.constant 0 : index
      %c0_28 = arith.constant 0 : index
      %51 = vector.load %arg8[%c0_27, %c0_28] : memref<16x1xf32, #tpu.memory_space<vmem>>, vector<16x1xf32>
      %c0_29 = arith.constant 0 : index
      %c0_30 = arith.constant 0 : index
      %52 = vector.load %arg9[%c0_29, %c0_30] : memref<16x1xf32, #tpu.memory_space<vmem>>, vector<16x1xf32>
      %53 = math.log %52 : vector<16x1xf32>
      %54 = arith.addf %51, %53 : vector<16x1xf32>
      %c0_31 = arith.constant 0 : index
      %c0_32 = arith.constant 0 : index
      %55 = vector.load %arg7[%c0_31, %c0_32] : memref<16x1xf32, #tpu.memory_space<vmem>>, vector<16x1xf32>
      tpu.vector_store %arg7[%c0_31, %c0_32], %54 {strides = array<i32>} : memref<16x1xf32, #tpu.memory_space<vmem>>, vector<16x1xf32>,
    } else {
    }
    return
  }
  func.func @transform_0(%arg0: i32, %arg1: i32) -> (i32, i32) {
    %c0_i32 = arith.constant 0 : i32
    %c0_i32_0 = arith.constant 0 : i32
    return %arg0, %c0_i32 : i32, i32
  }
  func.func @transform_1(%arg0: i32, %arg1: i32) -> (i32, i32) {
    %c0_i32 = arith.constant 0 : i32
    %c0_i32_0 = arith.constant 0 : i32
    %c0_i32_1 = arith.constant 0 : i32
    return %c0_i32, %c0_i32_0 : i32, i32
  }
  func.func @transform_2(%arg0: i32, %arg1: i32) -> (i32, i32) {
    %c0_i32 = arith.constant 0 : i32
    %c0_i32_0 = arith.constant 0 : i32
    %c0_i32_1 = arith.constant 0 : i32
    return %c0_i32, %c0_i32_0 : i32, i32
  }
  func.func @transform_3(%arg0: i32, %arg1: i32) -> (i32, i32) {
    %c0_i32 = arith.constant 0 : i32
    %c0_i32_0 = arith.constant 0 : i32
    return %c0_i32, %arg1 : i32, i32
  }
  func.func @transform_4(%arg0: i32, %arg1: i32) -> (i32, i32) {
    %c0_i32 = arith.constant 0 : i32
    %c0_i32_0 = arith.constant 0 : i32
    return %c0_i32, %arg1 : i32, i32
  }
  func.func @transform_5(%arg0: i32, %arg1: i32) -> (i32, i32) {
    %c0_i32 = arith.constant 0 : i32
    %c0_i32_0 = arith.constant 0 : i32
    return %arg0, %c0_i32 : i32, i32
  }
}

</mosaic_0001>

<llo_original>
// kernel: tpu_custom_call.1
$region0: #{tpu_custom_call.1}
  #allocation0 [shape = 'u32[]', space=smem, size = 0x4, offset = 0x4, fixed_abs, tag = 'smem constant byte address 0x4 - core index']
  #allocation1 [shape = 'u32[72,128]{1,0:T(1,128)}', space=vmem, size = 0x9000, scoped, tag = 'internal scratch']
  %s0 = inlined_call_operand.hbm [shape: f32[8,128], index: 0, kind: input, shape index: {}]
  %s1 = inlined_call_operand.hbm [shape: f32[8,128], index: 1, kind: output, shape index: {}]
  %s2 = sld [smem:[#allocation0]]
  $region18: #{tpu_custom_call.1} parent=0
    _
  %s4 = ssub.s32 1, %s2
  %s5 = scalar_select 0, %s4, %s2
  $region1: #{tpu_custom_call.1} parent=0
    #allocation2 [shape = 'u8[4096]{0}', space=vmem, size = 0x1000, scoped, tag = 'input window, operand 0, single buffered']
    #allocation3 [shape = 's32[1]{0}', space=sflag, size = 0x4, scoped, tag = 'scoped memory for tpu_custom_call.1']
    #allocation4 [shape = 's32[1]{0}', space=sflag, size = 0x4, scoped, tag = 'scoped memory for tpu_custom_call.1']
    #allocation5 [shape = 'u8[4096]{0}', space=vmem, size = 0x1000, scoped, tag = 'output window, operand 0, single buffered']
    %6 = vsyncpa [#allocation3], 0
    %7 = vsyncpa [#allocation4], 0
    // Predicated region
    $region2: #{tpu_custom_call.1} parent=1 // pred_check
      _
    $region3: #{tpu_custom_call.1} parent=1 // pred_check_branch
      %9 = sbr.rel (0) target = $region5
    $region4: #{tpu_custom_call.1} parent=1 // pred_region
      %11 = vsyncadd [#allocation3], 0
      %s13 = sshll.u32 %s0, 4
      %s14 = int_to_ptr.hbm [resolvable:$true] %s13
      %s15 = sshll.u32 [#allocation2], 4
      %s16 = int_to_ptr.vmem [resolvable:$true] %s15
      %18 = dma.hbm_to_vmem [thread:$0]  %s14, 128, %s16, [#allocation3]
    $region5: #{tpu_custom_call.1} parent=1 // pred_fallthru
      _
    // Predicated region
    $region6: #{tpu_custom_call.1} parent=1 // pred_check
      _
    $region7: #{tpu_custom_call.1} parent=1 // pred_check_branch
      %20 = sbr.rel (0) target = $region9
    $region8: #{tpu_custom_call.1} parent=1 // pred_region
      %22 = dma.done [#allocation3], 128
    $region9: #{tpu_custom_call.1} parent=1 // pred_fallthru
      _
    %v23 = vld [vmem:[#allocation2] sm:$0xff]
    %24 = vrot.lane.b32.xlu0 %v23, 1
    %v25 = vpop.permute.xlu0 %24
    %26 = vst [vmem:[#allocation5] sm:$0xff] %v25
    // Predicated region
    $region10: #{tpu_custom_call.1} parent=1 // pred_check
      _
    $region11: #{tpu_custom_call.1} parent=1 // pred_check_branch
      %28 = sbr.rel (0) target = $region13
    $region12: #{tpu_custom_call.1} parent=1 // pred_region
      %30 = vsyncadd [#allocation4], 0
      %s32 = sshll.u32 [#allocation5], 4
      %s33 = int_to_ptr.vmem [resolvable:$true] %s32
      %s34 = sshll.u32 %s1, 4
      %s35 = int_to_ptr.hbm [resolvable:$true] %s34
      %37 = dma.vmem_to_hbm [thread:$0]  %s33, 128, %s35, [#allocation4]
    $region13: #{tpu_custom_call.1} parent=1 // pred_fallthru
      _
    // Predicated region
    $region14: #{tpu_custom_call.1} parent=1 // pred_check
      _
    $region15: #{tpu_custom_call.1} parent=1 // pred_check_branch
      %39 = sbr.rel (0) target = $region17
    $region16: #{tpu_custom_call.1} parent=1 // pred_region
      %41 = dma.done [#allocation4], 128
    $region17: #{tpu_custom_call.1} parent=1 // pred_fallthru
      _
    %42 = vsyncpa [#allocation3], 1
    %43 = vsyncpa [#allocation4], 1

// kernel: transformer_forward.10
$region0: #{transformer_forward.10}
  #allocation0 [shape = 'u32[]', space=smem, size = 0x4, offset = 0x4, fixed_abs, tag = 'smem constant byte address 0x4 - core index']
  #allocation1 [shape = 'u32[72,128]{1,0:T(1,128)}', space=vmem, size = 0x9000, scoped, tag = 'internal scratch']
  %s0 = inlined_call_operand.vmem [shape: f32[16,32], index: 0, kind: input, shape index: {}]
  %s1 = inlined_call_operand.vmem [shape: f32[1,32], index: 1, kind: input, shape index: {}]
  %s2 = inlined_call_operand.vmem [shape: f32[1,32], index: 2, kind: input, shape index: {}]
  %s3 = inlined_call_operand.vmem [shape: bf16[32,96], index: 3, kind: input, shape index: {}]
  %s4 = inlined_call_operand.vmem [shape: f32[1,96], index: 4, kind: input, shape index: {}]
  %s5 = inlined_call_operand.vmem [shape: f32[16,32], index: 5, kind: output, shape index: {0}]
  %s6 = inlined_call_operand.vmem [shape: bf16[16,96], index: 6, kind: output, shape index: {1}]
  %7 = xla_tuple %s5, %s6
  %s8 = sld [smem:[#allocation0]]
  $region42: #{transformer_forward.10} parent=0
    _
  %s10 = ssub.s32 1, %s8
  %s11 = scalar_select 0, %s10, %s8
  // Predicated region
  $region2: #{transformer_forward.10} parent=0 // pred_check
    _
  $region3: #{transformer_forward.10} parent=0 // pred_check_branch
    %13 = sbr.rel (0) target = $region5
  $region4: #{transformer_forward.10} parent=0 // pred_region
    _
  $region5: #{transformer_forward.10} parent=0 // pred_fallthru
    _
  // Predicated region
  $region6: #{transformer_forward.10} parent=0 // pred_check
    _
  $region7: #{transformer_forward.10} parent=0 // pred_check_branch
    %15 = sbr.rel (0) target = $region9
  $region8: #{transformer_forward.10} parent=0 // pred_region
    _
  $region9: #{transformer_forward.10} parent=0 // pred_fallthru
    _
  // Predicated region
  $region10: #{transformer_forward.10} parent=0 // pred_check
    _
  $region11: #{transformer_forward.10} parent=0 // pred_check_branch
    %17 = sbr.rel (0) target = $region13
  $region12: #{transformer_forward.10} parent=0 // pred_region
    _
  $region13: #{transformer_forward.10} parent=0 // pred_fallthru
    _
  // Predicated region
  $region14: #{transformer_forward.10} parent=0 // pred_check
    _
  $region15: #{transformer_forward.10} parent=0 // pred_check_branch
    %19 = sbr.rel (0) target = $region17
  $region16: #{transformer_forward.10} parent=0 // pred_region
    _
  $region17: #{transformer_forward.10} parent=0 // pred_fallthru
    _
  // Predicated region
  $region18: #{transformer_forward.10} parent=0 // pred_check
    _
  $region19: #{transformer_forward.10} parent=0 // pred_check_branch
    %21 = sbr.rel (0) target = $region21
  $region20: #{transformer_forward.10} parent=0 // pred_region
    _
  $region21: #{transformer_forward.10} parent=0 // pred_fallthru
    _
  %v23 = vld [vmem:[%s0] sm:$0xff]
  %v24 = vld [vmem:[%s0 + $0x8] sm:$0xff]
  %v25 = vld [vmem:[%s1] sm:$0x1]
  %v26 = vld [vmem:[%s2] sm:$0x1]
  %vm27 = vcmask 261120
  %v28 = vsel %vm27, %v23, 0.0
  %29 = vadd.xlane.f32.xlu0 %v28
  %v30 = vpop.xlane.xlu0 %29
  %v31 = vsel %vm27, %v24, 0.0
  %32 = vadd.xlane.f32.xlu0 %v31
  %v33 = vpop.xlane.xlu0 %32
  %v34 = vrcp.pop 32.0
  %v35 = vmul.f32 32.0, %v34
  %v36 = vsub.f32 1.0, %v35
  %v37 = vmul.f32 %v34, %v36
  %v38 = vadd.f32 %v34, %v37
  %vm39 = vweird.f32 %v34
  %v40 = vsel %vm39, %v34, %v38
  %v41 = vmul.f32 %v30, %v40
  %v42 = vmul.f32 %v33, %v40
  %v43 = vsub.f32 %v23, %v41
  %v44 = vsub.f32 %v24, %v42
  %v45 = vmul.f32 %v43, %v43
  %v46 = vmul.f32 %v44, %v44
  %v47 = vsel %vm27, %v45, 0.0
  %48 = vadd.xlane.f32.xlu0 %v47
  %v49 = vpop.xlane.xlu0 %48
  %v50 = vsel %vm27, %v46, 0.0
  %51 = vadd.xlane.f32.xlu0 %v50
  %v52 = vpop.xlane.xlu0 %51
  %v53 = vmul.f32 %v49, %v40
  %v54 = vmul.f32 %v52, %v40
  %v55 = vadd.f32 %v53, 1e-05
  %v56 = vadd.f32 %v54, 1e-05
  %v57 = vrsqrt.pop %v55
  %v58 = vmul.f32 %v57, %v55
  %v59 = vmul.f32 %v58, %v57
  %v60 = vmul.f32 0.5, %v59
  %v61 = vsub.f32 1.5, %v60
  %v62 = vmul.f32 %v57, %v61
  %vm63 = vweird.f32 %v55
  %vm64 = vweird.f32 %v57
  %vm65 = vmor %vm63, %vm64
  %v66 = vsel %vm65, %v57, %v62
  %v67 = vrsqrt.pop %v56
  %v68 = vmul.f32 %v67, %v56
  %v69 = vmul.f32 %v68, %v67
  %v70 = vmul.f32 0.5, %v69
  %v71 = vsub.f32 1.5, %v70
  %v72 = vmul.f32 %v67, %v71
  %vm73 = vweird.f32 %v56
  %vm74 = vweird.f32 %v67
  %vm75 = vmor %vm73, %vm74
  %v76 = vsel %vm75, %v67, %v72
  %v77 = vmul.f32 %v43, %v66
  %v78 = vmul.f32 %v44, %v76
  %v80 = vperm.slane %v25, 0
  %v82 = vmul.f32 %v77, %v80
  %v83 = vmul.f32 %v78, %v80
  %v85 = vperm.slane %v26, 0
  %v87 = vadd.f32 %v82, %v85
  %v88 = vadd.f32 %v83, %v85
  %v89 = vpack.c.bf16 %v88, %v87
  %v90 = vld [vmem:[%s3] sm:$0xf]
  %v91 = vld [vmem:[%s3 + $0x4] sm:$0xf]
  %v92 = vld [vmem:[%s3 + $0x8] sm:$0xf]
  %v93 = vld [vmem:[%s3 + $0xc] sm:$0xf]
  %v94 = vld [vmem:[%s4] sm:$0x1]
  %v96 = vperm.slane %v94, 0
  %v102 = vunpack.c.l.b16 %v90
  %v103 = vunpack.c.l.b16 %v91
  %v104 = vunpack.c.l.b16 %v92
  %v105 = vunpack.c.l.b16 %v93
  %v106 = vpack.c.b16 %v103, %v102
  %v107 = vpack.c.b16 %v105, %v104
  %v111 = vsel %vm27, %v89, 0
  %113 = vmatpush.bf16.msra.mxu0 0
  %114 = vmatpush.bf16.msra.mxu0 0
  %115 = vmatpush.bf16.msra.mxu0 0
  %116 = vmatpush.bf16.msra.mxu0 0
  %117 = vmatpush.bf16.msra.mxu0 0
  %118 = vmatpush.bf16.msra.mxu0 0
  %119 = vmatpush.bf16.msra.mxu0 %v107
  %120 = vmatpush.bf16.msra.mxu0 %v106
  %121 = vmatmul.bf16.gmra.mxu0 %v111
  %v122 = vpop.f32.mrf.mxu0
  %v123 = vadd.f32 %v96, %v122
  %v124 = vpop.f32.mrf.mxu0
  %v125 = vadd.f32 %v96, %v124
  %126 = vdwg.mxu0
  %p127 = scmp.eq.s32.totalorder 0, 0
  // Predicated region
  $region22: #{transformer_forward.10} parent=0 // pred_check
    %p128 = pneg %p127
  $region23: #{transformer_forward.10} parent=0 // pred_check_branch
    %130 = sbr.rel (%p128) target = $region25
  $region24: #{transformer_forward.10} parent=0 // pred_region
    %131 = vst.msk [vmem:[%s5] sm:$0xff] %vm27, %v87
    %132 = vst.msk [vmem:[%s5 + $0x8] sm:$0xff] %vm27, %v88
  $region25: #{transformer_forward.10} parent=0 // pred_fallthru
    _
  %v133 = vpack.c.bf16 %v123, %v123
  %v134 = vpack.c.bf16 %v125, %v125
  %vm135 = vcmask 781312
  %136 = vst.msk [vmem:[%s6] sm:$0xf] %vm135, %v133
  %137 = vst.msk [vmem:[%s6 + $0x4] sm:$0xf] %vm135, %v134
  // Predicated region
  $region26: #{transformer_forward.10} parent=0 // pred_check
    _
  $region27: #{transformer_forward.10} parent=0 // pred_check_branch
    %139 = sbr.rel (0) target = $region29
  $region28: #{transformer_forward.10} parent=0 // pred_region
    _
  $region29: #{transformer_forward.10} parent=0 // pred_fallthru
    _
  // Predicated region
  $region30: #{transformer_forward.10} parent=0 // pred_check
    _
  $region31: #{transformer_forward.10} parent=0 // pred_check_branch
    %141 = sbr.rel (0) target = $region33
  $region32: #{transformer_forward.10} parent=0 // pred_region
    _
  $region33: #{transformer_forward.10} parent=0 // pred_fallthru
    _
  // Predicated region
  $region34: #{transformer_forward.10} parent=0 // pred_check
    _
  $region35: #{transformer_forward.10} parent=0 // pred_check_branch
    %143 = sbr.rel (0) target = $region37
  $region36: #{transformer_forward.10} parent=0 // pred_region
    _
  $region37: #{transformer_forward.10} parent=0 // pred_fallthru
    _
  // Predicated region
  $region38: #{transformer_forward.10} parent=0 // pred_check
    _
  $region39: #{transformer_forward.10} parent=0 // pred_check_branch
    %145 = sbr.rel (0) target = $region41
  $region40: #{transformer_forward.10} parent=0 // pred_region
    _
  $region41: #{transformer_forward.10} parent=0 // pred_fallthru
    _

// kernel: transformer_forward.11
$region0: #{transformer_forward.11}
  #allocation0 [shape = 'u32[]', space=smem, size = 0x4, offset = 0x4, fixed_abs, tag = 'smem constant byte address 0x4 - core index']
  #allocation1 [shape = 'u32[72,128]{1,0:T(1,128)}', space=vmem, size = 0x9000, scoped, tag = 'internal scratch']
  %s0 = inlined_call_operand.vmem [shape: bf16[2,4,8,8], index: 0, kind: input, shape index: {}]
  %s1 = inlined_call_operand.vmem [shape: bf16[2,4,8,8], index: 1, kind: input, shape index: {}]
  %s2 = inlined_call_operand.vmem [shape: bf16[2,4,8,8], index: 2, kind: input, shape index: {}]
  %s3 = inlined_call_operand.vmem [shape: bf16[8,8], index: 3, kind: input, shape index: {}]
  %s4 = inlined_call_operand.vmem [shape: f32[2,4,8,8], index: 4, kind: output, shape index: {}]
  %s5 = sld [smem:[#allocation0]]
  $region49: #{transformer_forward.11} parent=0
    _
  %s7 = ssub.s32 1, %s5
  %s8 = scalar_select 0, %s7, %s5
  loop: start=0, step=1, limit=10
  $region2: #{transformer_forward.11} parent=0 // loop_pre_header
    _
  $region3: #{transformer_forward.11} parent=0 // loop_header
    %s10 = sphi 0, %s14
    %p11 = scmp.ge.s32.totalorder %s10, 10
    %s17 = sphi 0, %s29
    %s18 = sphi 0, %s25
    %s19 = sphi 0, %s17
    %s20 = sphi 0, %s18
    %s21 = sphi 0, %s19
    %s22 = sphi 0, %s20
    %s34 = sphi 0, %s36
    %s37 = sphi 0, %s34
    %s38 = sphi 0, %s37
    %s54 = sphi 0, %s38
    %s62 = sphi 0, %s64
    %s65 = sphi 0, %s62
    %s66 = sphi 0, %s65
    %s82 = sphi 0, %s66
    %s90 = sphi 0, %s92
    %s93 = sphi 0, %s90
    %s94 = sphi 0, %s93
    %s110 = sphi 0, %s94
    %s114 = sphi 0, %s114
    %s116 = sphi 0, %s114
    %s117 = sphi 0, %s116
    %s131 = sphi 0, %s117
    %s139 = sphi 0, %s141
    %s142 = sphi 0, %s139
    %s143 = sphi 0, %s142
    %s159 = sphi 0, %s143
  $region4: #{transformer_forward.11} parent=0 // loop_header_branch
    %13 = sbr.rel (%p11) target = $region8
  $region5: #{transformer_forward.11} parent=0 // loop_body
    %s15 = ssub.s32 %s10, 1
    %s16 = ssub.s32 %s10, 2
    %s23 = sadd.s32 1, %s18
    %p24 = scmp.ge.s32.totalorder %s23, 4
    %s25 = scalar_select %p24, 0, %s23
    %s26 = sadd.s32 1, %s17
    %s27 = scalar_select %p24, %s26, %s17
    %p28 = scmp.ge.s32.totalorder %s27, 2
    %s29 = scalar_select %p28, 0, %s27
    %s30 = ssub.s32 %s17, %s29
    %s31 = ssub.s32 %s18, %s25
    %s32 = sor.u32 %s30, %s31
    %p33 = scmp.eq.s32.totalorder %s32, 0
    %s35 = sadd.s32 %s34, 1
    %s36 = scalar_select %p33, %s34, %s35
    %p39 = pneg %p33
    %p40 = scmp.eq.s32.totalorder %s10, 7
    %p41 = por %p39, %p40
    %p42 = scmp.ne.s32.totalorder %s34, %s37
    %p43 = scmp.eq.s32.totalorder %s10, 0
    %p44 = por %p42, %p43
    %p45 = scmp.ne.s32.totalorder %s34, %s37
    %p46 = scmp.eq.s32.totalorder %s15, 7
    %p47 = por %p45, %p46
    %p48 = scmp.ne.s32.totalorder %s37, %s38
    %p49 = scmp.eq.s32.totalorder %s15, 0
    %p50 = por %p48, %p49
    %p51 = scmp.ne.s32.totalorder %s37, %s38
    %p52 = scmp.eq.s32.totalorder %s16, 7
    %p53 = por %p51, %p52
    %p55 = scmp.ne.s32.totalorder %s38, %s54
    %p56 = scmp.eq.s32.totalorder %s16, 0
    %p57 = por %p55, %p56
    %s58 = ssub.s32 %s17, %s29
    %s59 = ssub.s32 %s18, %s25
    %s60 = sor.u32 %s58, %s59
    %p61 = scmp.eq.s32.totalorder %s60, 0
    %s63 = sadd.s32 %s62, 1
    %s64 = scalar_select %p61, %s62, %s63
    %p67 = pneg %p61
    %p68 = scmp.eq.s32.totalorder %s10, 7
    %p69 = por %p67, %p68
    %p70 = scmp.ne.s32.totalorder %s62, %s65
    %p71 = scmp.eq.s32.totalorder %s10, 0
    %p72 = por %p70, %p71
    %p73 = scmp.ne.s32.totalorder %s62, %s65
    %p74 = scmp.eq.s32.totalorder %s15, 7
    %p75 = por %p73, %p74
    %p76 = scmp.ne.s32.totalorder %s65, %s66
    %p77 = scmp.eq.s32.totalorder %s15, 0
    %p78 = por %p76, %p77
    %p79 = scmp.ne.s32.totalorder %s65, %s66
    %p80 = scmp.eq.s32.totalorder %s16, 7
    %p81 = por %p79, %p80
    %p83 = scmp.ne.s32.totalorder %s66, %s82
    %p84 = scmp.eq.s32.totalorder %s16, 0
    %p85 = por %p83, %p84
    %s86 = ssub.s32 %s17, %s29
    %s87 = ssub.s32 %s18, %s25
    %s88 = sor.u32 %s86, %s87
    %p89 = scmp.eq.s32.totalorder %s88, 0
    %s91 = sadd.s32 %s90, 1
    %s92 = scalar_select %p89, %s90, %s91
    %p95 = pneg %p89
    %p96 = scmp.eq.s32.totalorder %s10, 7
    %p97 = por %p95, %p96
    %p98 = scmp.ne.s32.totalorder %s90, %s93
    %p99 = scmp.eq.s32.totalorder %s10, 0
    %p100 = por %p98, %p99
    %p101 = scmp.ne.s32.totalorder %s90, %s93
    %p102 = scmp.eq.s32.totalorder %s15, 7
    %p103 = por %p101, %p102
    %p104 = scmp.ne.s32.totalorder %s93, %s94
    %p105 = scmp.eq.s32.totalorder %s15, 0
    %p106 = por %p104, %p105
    %p107 = scmp.ne.s32.totalorder %s93, %s94
    %p108 = scmp.eq.s32.totalorder %s16, 7
    %p109 = por %p107, %p108
    %p111 = scmp.ne.s32.totalorder %s94, %s110
    %p112 = scmp.eq.s32.totalorder %s16, 0
    %p113 = por %p111, %p112
    %s115 = sadd.s32 %s114, 1
    %p118 = scmp.eq.s32.totalorder %s10, 7
    %p119 = scmp.ne.s32.totalorder %s114, %s116
    %p120 = scmp.eq.s32.totalorder %s10, 0
    %p121 = por %p119, %p120
    %p122 = scmp.ne.s32.totalorder %s114, %s116
    %p123 = scmp.eq.s32.totalorder %s15, 7
    %p124 = por %p122, %p123
    %p125 = scmp.ne.s32.totalorder %s116, %s117
    %p126 = scmp.eq.s32.totalorder %s15, 0
    %p127 = por %p125, %p126
    %p128 = scmp.ne.s32.totalorder %s116, %s117
    %p129 = scmp.eq.s32.totalorder %s16, 7
    %p130 = por %p128, %p129
    %p132 = scmp.ne.s32.totalorder %s117, %s131
    %p133 = scmp.eq.s32.totalorder %s16, 0
    %p134 = por %p132, %p133
    %s135 = ssub.s32 %s17, %s29
    %s136 = ssub.s32 %s18, %s25
    %s137 = sor.u32 %s135, %s136
    %p138 = scmp.eq.s32.totalorder %s137, 0
    %s140 = sadd.s32 %s139, 1
    %s141 = scalar_select %p138, %s139, %s140
    %p144 = pneg %p138
    %p145 = scmp.eq.s32.totalorder %s10, 7
    %p146 = por %p144, %p145
    %p147 = scmp.ne.s32.totalorder %s139, %s142
    %p148 = scmp.eq.s32.totalorder %s10, 0
    %p149 = por %p147, %p148
    %p150 = scmp.ne.s32.totalorder %s139, %s142
    %p151 = scmp.eq.s32.totalorder %s15, 7
    %p152 = por %p150, %p151
    %p153 = scmp.ne.s32.totalorder %s142, %s143
    %p154 = scmp.eq.s32.totalorder %s15, 0
    %p155 = por %p153, %p154
    %p156 = scmp.ne.s32.totalorder %s142, %s143
    %p157 = scmp.eq.s32.totalorder %s16, 7
    %p158 = por %p156, %p157
    %p160 = scmp.ne.s32.totalorder %s143, %s159
    %p161 = scmp.eq.s32.totalorder %s16, 0
    %p162 = por %p160, %p161
    %p163 = scmp.le.s32.totalorder 1, %s10
    %p164 = scmp.lt.s32.totalorder %s10, 9
    %p165 = pnand %p163, %p164
    %p166 = pneg %p165
    // Predicated region
    $region9: #{transformer_forward.11} parent=5 // pred_check
      _
    $region10: #{transformer_forward.11} parent=5 // pred_check_branch
      %168 = sbr.rel (%p165) target = $region12
    $region11: #{transformer_forward.11} parent=5 // pred_region
      %s169 = ssub.s32 %s10, 1
      // Predicated region
      $region13: #{transformer_forward.11} parent=11 // pred_check
        %p170 = pneg %p127
      $region14: #{transformer_forward.11} parent=11 // pred_check_branch
        %172 = sbr.rel (%p170) target = $region16
      $region15: #{transformer_forward.11} parent=11 // pred_region
        _
      $region16: #{transformer_forward.11} parent=11 // pred_fallthru
        _
    $region12: #{transformer_forward.11} parent=5 // pred_fallthru
      _
    %p173 = scmp.lt.s32.totalorder %s10, 8
    // Predicated region
    $region17: #{transformer_forward.11} parent=5 // pred_check
      %p174 = pneg %p173
    $region18: #{transformer_forward.11} parent=5 // pred_check_branch
      %176 = sbr.rel (%p174) target = $region20
    $region19: #{transformer_forward.11} parent=5 // pred_region
      // Predicated region
      $region21: #{transformer_forward.11} parent=19 // pred_check
        %p177 = pneg %p44
      $region22: #{transformer_forward.11} parent=19 // pred_check_branch
        %179 = sbr.rel (%p177) target = $region24
      $region23: #{transformer_forward.11} parent=19 // pred_region
        %p180 = scmp.lt.s32.totalorder %s17, 1
        %s181 = scalar_select %p180, %s17, 1
        %p182 = scmp.lt.s32.totalorder %s18, 3
        %s183 = scalar_select %p182, %s18, 3
        %s184 = smul.addr %s181, 4
        %s185 = sadd.s32 %s183, %s184
        %s186 = smul.addr %s185, 4
        %s187 = scalar_lea.vmem %s0, %s186
      $region24: #{transformer_forward.11} parent=19 // pred_fallthru
        _
      // Predicated region
      $region25: #{transformer_forward.11} parent=19 // pred_check
        %p188 = pneg %p72
      $region26: #{transformer_forward.11} parent=19 // pred_check_branch
        %190 = sbr.rel (%p188) target = $region28
      $region27: #{transformer_forward.11} parent=19 // pred_region
        %p191 = scmp.lt.s32.totalorder %s17, 1
        %s192 = scalar_select %p191, %s17, 1
        %p193 = scmp.lt.s32.totalorder %s18, 3
        %s194 = scalar_select %p193, %s18, 3
        %s195 = smul.addr %s192, 4
        %s196 = sadd.s32 %s194, %s195
        %s197 = smul.addr %s196, 4
        %s198 = scalar_lea.vmem %s1, %s197
      $region28: #{transformer_forward.11} parent=19 // pred_fallthru
        _
      // Predicated region
      $region29: #{transformer_forward.11} parent=19 // pred_check
        %p199 = pneg %p100
      $region30: #{transformer_forward.11} parent=19 // pred_check_branch
        %201 = sbr.rel (%p199) target = $region32
      $region31: #{transformer_forward.11} parent=19 // pred_region
        %p202 = scmp.lt.s32.totalorder %s17, 1
        %s203 = scalar_select %p202, %s17, 1
        %p204 = scmp.lt.s32.totalorder %s18, 3
        %s205 = scalar_select %p204, %s18, 3
        %s206 = smul.addr %s203, 4
        %s207 = sadd.s32 %s205, %s206
        %s208 = smul.addr %s207, 4
        %s209 = scalar_lea.vmem %s2, %s208
      $region32: #{transformer_forward.11} parent=19 // pred_fallthru
        _
    $region20: #{transformer_forward.11} parent=5 // pred_fallthru
      _
    %p210 = scmp.le.s32.totalorder 1, %s10
    %p211 = scmp.lt.s32.totalorder %s10, 9
    %p212 = pnand %p210, %p211
    %p213 = pneg %p212
    // Predicated region
    $region33: #{transformer_forward.11} parent=5 // pred_check
      _
    $region34: #{transformer_forward.11} parent=5 // pred_check_branch
      %215 = sbr.rel (%p212) target = $region36
    $region35: #{transformer_forward.11} parent=5 // pred_region
      %s216 = ssub.s32 %s10, 1
      %p217 = scmp.lt.s32.totalorder %s19, 1
      %s218 = scalar_select %p217, %s19, 1
      %p219 = scmp.lt.s32.totalorder %s20, 3
      %s220 = scalar_select %p219, %s20, 3
      %s221 = smul.addr %s218, 4
      %s222 = sadd.s32 %s220, %s221
      %s223 = smul.addr %s222, 4
      %s224 = scalar_lea.vmem %s0, %s223
      %p225 = pneg %p50
      %p226 = pneg %p47
      %p227 = scmp.lt.s32.totalorder %s19, 1
      %s228 = scalar_select %p227, %s19, 1
      %p229 = scmp.lt.s32.totalorder %s20, 3
      %s230 = scalar_select %p229, %s20, 3
      %s231 = smul.addr %s228, 4
      %s232 = sadd.s32 %s230, %s231
      %s233 = smul.addr %s232, 4
      %s234 = scalar_lea.vmem %s1, %s233
      %p235 = pneg %p78
      %p236 = pneg %p75
      %p237 = scmp.lt.s32.totalorder %s19, 1
      %s238 = scalar_select %p237, %s19, 1
      %p239 = scmp.lt.s32.totalorder %s20, 3
      %s240 = scalar_select %p239, %s20, 3
      %s241 = smul.addr %s238, 4
      %s242 = sadd.s32 %s240, %s241
      %s243 = smul.addr %s242, 4
      %s244 = scalar_lea.vmem %s2, %s243
      %p245 = pneg %p106
      %p246 = pneg %p103
      %p247 = pneg %p127
      %p248 = pneg %p124
      %p249 = pneg %p155
      %p250 = pneg %p152
      %p251 = scmp.lt.s32.totalorder %s19, 1
      %s252 = scalar_select %p251, %s19, 1
      %p253 = scmp.lt.s32.totalorder %s20, 3
      %s254 = scalar_select %p253, %s20, 3
      %s255 = smul.addr %s252, 4
      %s256 = sadd.s32 %s254, %s255
      %s257 = smul.addr %s256, 8
      %s258 = scalar_lea.vmem %s4, %s257
      %p259 = scmp.lt.s32.totalorder %s19, 1
      %s260 = scalar_select %p259, %s19, 1
      %p261 = scmp.lt.s32.totalorder %s20, 3
      %s262 = scalar_select %p261, %s20, 3
      %s263 = smul.addr %s260, 4
      %s264 = sadd.s32 %s262, %s263
      %s265 = smul.addr %s264, 4
      %s266 = scalar_lea.vmem %s0, %s265
      %p267 = scmp.lt.s32.totalorder %s19, 1
      %s268 = scalar_select %p267, %s19, 1
      %p269 = scmp.lt.s32.totalorder %s20, 3
      %s270 = scalar_select %p269, %s20, 3
      %s271 = smul.addr %s268, 4
      %s272 = sadd.s32 %s270, %s271
      %s273 = smul.addr %s272, 4
      %s274 = scalar_lea.vmem %s1, %s273
      %p275 = scmp.lt.s32.totalorder %s19, 1
      %s276 = scalar_select %p275, %s19, 1
      %p277 = scmp.lt.s32.totalorder %s20, 3
      %s278 = scalar_select %p277, %s20, 3
      %s279 = smul.addr %s276, 4
      %s280 = sadd.s32 %s278, %s279
      %s281 = smul.addr %s280, 4
      %s282 = scalar_lea.vmem %s2, %s281
      %p283 = scmp.lt.s32.totalorder %s19, 1
      %s284 = scalar_select %p283, %s19, 1
      %p285 = scmp.lt.s32.totalorder %s20, 3
      %s286 = scalar_select %p285, %s20, 3
      %s287 = smul.addr %s284, 4
      %s288 = sadd.s32 %s286, %s287
      %s289 = smul.addr %s288, 8
      %s290 = scalar_lea.vmem %s4, %s289
      %v292 = vld [vmem:[%s266] sm:$0xf]
      %v293 = vld [vmem:[%s274] sm:$0xf]
      %v294 = vld [vmem:[%s282] sm:$0xf]
      %v295 = vld [vmem:[%s3] sm:$0xf]
      %v296 = vlaneseq
      %v297 = vshrl.u32 %v296, 7
      %v298 = vlaneseq
      %v299 = vand.u32 %v298, 127
      %vm300 = vcmp.gt.s32.totalorder %v299, %v297
      %v301 = vsub.s32 7, %v297
      %vm302 = vcmask 64512
      %v304 = vsel %vm302, %v292, 0
      %v307 = vsel %vm302, %v295, 0
      %309 = vmatpush.bf16.xpose.msra.mxu0 0
      %310 = vmatpush.bf16.xpose.msra.mxu0 0
      %311 = vmatpush.bf16.xpose.msra.mxu0 0
      %312 = vmatpush.bf16.xpose.msra.mxu0 0
      %313 = vmatpush.bf16.xpose.msra.mxu0 0
      %314 = vmatpush.bf16.xpose.msra.mxu0 0
      %315 = vmatpush.bf16.xpose.msra.mxu0 0
      %316 = vmatpush.bf16.xpose.msra.mxu0 %v307
      %317 = vmatmul.bf16.gmra.mxu0 %v304
      %v318 = vpop.f32.mrf.mxu0
      %v319 = vadd.f32 0.0, %v318
      %v320 = vpop.f32.mrf.mxu0
      %321 = vdwg.mxu0
      %323 = vrot.lane.b32.xlu0 %v319, 127
      %v324 = vpop.permute.xlu0 %323
      %326 = vrot.lane.b32.xlu0 %v319, 7
      %v327 = vpop.permute.xlu0 %326
      %vm329 = vcmask 56320
      %v330 = vsel %vm329, %v324, %v327
      %v331 = vand.u32 %v301, 1
      %vm332 = vcmp.ne.s32.totalorder %v331, 0
      %v333 = vsel %vm332, %v330, %v319
      %335 = vrot.lane.b32.xlu0 %v333, 126
      %v336 = vpop.permute.xlu0 %335
      %338 = vrot.lane.b32.xlu0 %v333, 6
      %v339 = vpop.permute.xlu0 %338
      %vm341 = vcmask 48128
      %v342 = vsel %vm341, %v336, %v339
      %v343 = vand.u32 %v301, 2
      %vm344 = vcmp.ne.s32.totalorder %v343, 0
      %v345 = vsel %vm344, %v342, %v333
      %347 = vrot.lane.b32.xlu0 %v345, 124
      %v348 = vpop.permute.xlu0 %347
      %350 = vrot.lane.b32.xlu0 %v345, 4
      %v351 = vpop.permute.xlu0 %350
      %vm353 = vcmask 31744
      %v354 = vsel %vm353, %v348, %v351
      %v355 = vand.u32 %v301, 4
      %vm356 = vcmp.ne.s32.totalorder %v355, 0
      %v357 = vsel %vm356, %v354, %v345
      %v359 = vsel %vm302, %v293, 0
      %361 = vmatpush.bf16.xpose.msra.mxu0 0
      %362 = vmatpush.bf16.xpose.msra.mxu0 0
      %363 = vmatpush.bf16.xpose.msra.mxu0 0
      %364 = vmatpush.bf16.xpose.msra.mxu0 0
      %365 = vmatpush.bf16.xpose.msra.mxu0 0
      %366 = vmatpush.bf16.xpose.msra.mxu0 0
      %367 = vmatpush.bf16.xpose.msra.mxu0 0
      %368 = vmatpush.bf16.xpose.msra.mxu0 %v359
      %369 = vmatmul.bf16.gmra.mxu0 %v304
      %v370 = vpop.f32.mrf.mxu0
      %v371 = vadd.f32 %v357, %v370
      %v372 = vpop.f32.mrf.mxu0
      %373 = vdwg.mxu0
      %v374 = vmul.f32 %v371, 0.35355338
      %v375 = vsel %vm300, -inf, %v374
      %v376 = vsel %vm302, %v375, -inf
      %377 = vmax.xlane.f32.xlu0 %v376
      %v378 = vpop.xlane.xlu0 %377
      %v379 = vsub.f32 %v375, %v378
      %v380 = vmul.f32 %v379, 1.442695
      %v381 = vpow.pop %v380
      %v382 = vsel %vm302, %v381, 0.0
      %383 = vadd.xlane.f32.xlu0 %v382
      %v384 = vpop.xlane.xlu0 %383
      %v385 = vrcp.pop %v384
      %v386 = vmul.f32 %v384, %v385
      %v387 = vsub.f32 1.0, %v386
      %v388 = vmul.f32 %v385, %v387
      %v389 = vadd.f32 %v385, %v388
      %vm390 = vweird.f32 %v384
      %vm391 = vweird.f32 %v385
      %vm392 = vmor %vm390, %vm391
      %v393 = vsel %vm392, %v385, %v389
      %v394 = vand.u32 2147483647, %v384
      %vm395 = vcmp.eq.f32.partialorder %v394, 8.507059e+37
      %v396 = vand.u32 %v384, 2147483648
      %v397 = vor.u32 1.1754944e-38, %v396
      %v398 = vsel %vm395, %v397, %v393
      %v399 = vmul.f32 %v381, %v398
      %v400 = vpack.c.bf16 %v399, %v399
      %v402 = vsel %vm302, %v400, 0
      %vm404 = vcmask 1043456
      %v406 = vsel %vm404, %v294, 0
      %408 = vmatpush.bf16.msra.mxu0 0
      %409 = vmatpush.bf16.msra.mxu0 0
      %410 = vmatpush.bf16.msra.mxu0 0
      %411 = vmatpush.bf16.msra.mxu0 0
      %412 = vmatpush.bf16.msra.mxu0 0
      %413 = vmatpush.bf16.msra.mxu0 0
      %414 = vmatpush.bf16.msra.mxu0 0
      %415 = vmatpush.bf16.msra.mxu0 %v406
      %416 = vmatmul.bf16.gmra.mxu0 %v402
      %v417 = vpop.f32.mrf.mxu0
      %v418 = vadd.f32 0.0, %v417
      %v419 = vpop.f32.mrf.mxu0
      %420 = vdwg.mxu0
      %421 = vst.msk [vmem:[%s290] sm:$0xff] %vm302, %v418
      %p422 = scmp.lt.s32.totalorder %s19, 1
      %s423 = scalar_select %p422, %s19, 1
      %p424 = scmp.lt.s32.totalorder %s20, 3
      %s425 = scalar_select %p424, %s20, 3
      %s426 = smul.addr %s423, 4
      %s427 = sadd.s32 %s425, %s426
      %s428 = smul.addr %s427, 8
      %s429 = scalar_lea.vmem %s4, %s428
      // Predicated region
      $region37: #{transformer_forward.11} parent=35 // pred_check
        %p430 = pneg %p152
      $region38: #{transformer_forward.11} parent=35 // pred_check_branch
        %432 = sbr.rel (%p430) target = $region40
      $region39: #{transformer_forward.11} parent=35 // pred_region
        _
      $region40: #{transformer_forward.11} parent=35 // pred_fallthru
        _
    $region36: #{transformer_forward.11} parent=5 // pred_fallthru
      _
    %p433 = scmp.le.s32.totalorder 2, %s10
    // Predicated region
    $region41: #{transformer_forward.11} parent=5 // pred_check
      %p434 = pneg %p433
    $region42: #{transformer_forward.11} parent=5 // pred_check_branch
      %436 = sbr.rel (%p434) target = $region44
    $region43: #{transformer_forward.11} parent=5 // pred_region
      %s437 = ssub.s32 %s10, 2
      // Predicated region
      $region45: #{transformer_forward.11} parent=43 // pred_check
        %p438 = pneg %p158
      $region46: #{transformer_forward.11} parent=43 // pred_check_branch
        %440 = sbr.rel (%p438) target = $region48
      $region47: #{transformer_forward.11} parent=43 // pred_region
        %p441 = scmp.lt.s32.totalorder %s21, 1
        %s442 = scalar_select %p441, %s21, 1
        %p443 = scmp.lt.s32.totalorder %s22, 3
        %s444 = scalar_select %p443, %s22, 3
        %s445 = smul.addr %s442, 4
        %s446 = sadd.s32 %s444, %s445
        %s447 = smul.addr %s446, 8
        %s448 = scalar_lea.vmem %s4, %s447
      $region48: #{transformer_forward.11} parent=43 // pred_fallthru
        _
    $region44: #{transformer_forward.11} parent=5 // pred_fallthru
      _
  $region6: #{transformer_forward.11} parent=0 // loop_footer
    %s14 = sadd.s32 1, %s10
  $region7: #{transformer_forward.11} parent=0 // loop_footer_branch
    %9 = sbr.rel target = $region3
  $region8: #{transformer_forward.11} parent=0 // loop_exit
    _

// kernel: transformer_forward.12
$region0: #{transformer_forward.12}
  #allocation0 [shape = 'u32[]', space=smem, size = 0x4, offset = 0x4, fixed_abs, tag = 'smem constant byte address 0x4 - core index']
  #allocation1 [shape = 'u32[72,128]{1,0:T(1,128)}', space=vmem, size = 0x9000, scoped, tag = 'internal scratch']
  %s0 = inlined_call_operand.vmem [shape: f32[16,32], index: 0, kind: input, shape index: {}]
  %s1 = inlined_call_operand.vmem [shape: f32[16,32], index: 1, kind: input, shape index: {}]
  %s2 = inlined_call_operand.vmem [shape: f32[1,32], index: 2, kind: input, shape index: {}]
  %s3 = inlined_call_operand.vmem [shape: f32[1,32], index: 3, kind: input, shape index: {}]
  %s4 = inlined_call_operand.vmem [shape: bf16[32,64], index: 4, kind: input, shape index: {}]
  %s5 = inlined_call_operand.vmem [shape: f32[1,64], index: 5, kind: input, shape index: {}]
  %s6 = inlined_call_operand.vmem [shape: f32[16,32], index: 6, kind: output, shape index: {0}]
  %s7 = inlined_call_operand.vmem [shape: bf16[16,64], index: 7, kind: output, shape index: {1}]
  %8 = xla_tuple %s6, %s7
  %s9 = sld [smem:[#allocation0]]
  $region46: #{transformer_forward.12} parent=0
    _
  %s11 = ssub.s32 1, %s9
  %s12 = scalar_select 0, %s11, %s9
  // Predicated region
  $region2: #{transformer_forward.12} parent=0 // pred_check
    _
  $region3: #{transformer_forward.12} parent=0 // pred_check_branch
    %14 = sbr.rel (0) target = $region5
  $region4: #{transformer_forward.12} parent=0 // pred_region
    _
  $region5: #{transformer_forward.12} parent=0 // pred_fallthru
    _
  // Predicated region
  $region6: #{transformer_forward.12} parent=0 // pred_check
    _
  $region7: #{transformer_forward.12} parent=0 // pred_check_branch
    %16 = sbr.rel (0) target = $region9
  $region8: #{transformer_forward.12} parent=0 // pred_region
    _
  $region9: #{transformer_forward.12} parent=0 // pred_fallthru
    _
  // Predicated region
  $region10: #{transformer_forward.12} parent=0 // pred_check
    _
  $region11: #{transformer_forward.12} parent=0 // pred_check_branch
    %18 = sbr.rel (0) target = $region13
  $region12: #{transformer_forward.12} parent=0 // pred_region
    _
  $region13: #{transformer_forward.12} parent=0 // pred_fallthru
    _
  // Predicated region
  $region14: #{transformer_forward.12} parent=0 // pred_check
    _
  $region15: #{transformer_forward.12} parent=0 // pred_check_branch
    %20 = sbr.rel (0) target = $region17
  $region16: #{transformer_forward.12} parent=0 // pred_region
    _
  $region17: #{transformer_forward.12} parent=0 // pred_fallthru
    _
  // Predicated region
  $region18: #{transformer_forward.12} parent=0 // pred_check
    _
  $region19: #{transformer_forward.12} parent=0 // pred_check_branch
    %22 = sbr.rel (0) target = $region21
  $region20: #{transformer_forward.12} parent=0 // pred_region
    _
  $region21: #{transformer_forward.12} parent=0 // pred_fallthru
    _
  // Predicated region
  $region22: #{transformer_forward.12} parent=0 // pred_check
    _
  $region23: #{transformer_forward.12} parent=0 // pred_check_branch
    %24 = sbr.rel (0) target = $region25
  $region24: #{transformer_forward.12} parent=0 // pred_region
    _
  $region25: #{transformer_forward.12} parent=0 // pred_fallthru
    _
  %v26 = vld [vmem:[%s0] sm:$0xff]
  %v27 = vld [vmem:[%s0 + $0x8] sm:$0xff]
  %v28 = vld [vmem:[%s1] sm:$0xff]
  %v29 = vld [vmem:[%s1 + $0x8] sm:$0xff]
  %v30 = vadd.f32 %v26, %v28
  %v31 = vadd.f32 %v27, %v29
  %v32 = vld [vmem:[%s2] sm:$0x1]
  %v33 = vld [vmem:[%s3] sm:$0x1]
  %vm34 = vcmask 261120
  %v35 = vsel %vm34, %v30, 0.0
  %36 = vadd.xlane.f32.xlu0 %v35
  %v37 = vpop.xlane.xlu0 %36
  %v38 = vsel %vm34, %v31, 0.0
  %39 = vadd.xlane.f32.xlu0 %v38
  %v40 = vpop.xlane.xlu0 %39
  %v41 = vrcp.pop 32.0
  %v42 = vmul.f32 32.0, %v41
  %v43 = vsub.f32 1.0, %v42
  %v44 = vmul.f32 %v41, %v43
  %v45 = vadd.f32 %v41, %v44
  %vm46 = vweird.f32 %v41
  %v47 = vsel %vm46, %v41, %v45
  %v48 = vmul.f32 %v37, %v47
  %v49 = vmul.f32 %v40, %v47
  %v50 = vsub.f32 %v30, %v48
  %v51 = vsub.f32 %v31, %v49
  %v52 = vmul.f32 %v50, %v50
  %v53 = vmul.f32 %v51, %v51
  %v54 = vsel %vm34, %v52, 0.0
  %55 = vadd.xlane.f32.xlu0 %v54
  %v56 = vpop.xlane.xlu0 %55
  %v57 = vsel %vm34, %v53, 0.0
  %58 = vadd.xlane.f32.xlu0 %v57
  %v59 = vpop.xlane.xlu0 %58
  %v60 = vmul.f32 %v56, %v47
  %v61 = vmul.f32 %v59, %v47
  %v62 = vadd.f32 %v60, 1e-05
  %v63 = vadd.f32 %v61, 1e-05
  %v64 = vrsqrt.pop %v62
  %v65 = vmul.f32 %v64, %v62
  %v66 = vmul.f32 %v65, %v64
  %v67 = vmul.f32 0.5, %v66
  %v68 = vsub.f32 1.5, %v67
  %v69 = vmul.f32 %v64, %v68
  %vm70 = vweird.f32 %v62
  %vm71 = vweird.f32 %v64
  %vm72 = vmor %vm70, %vm71
  %v73 = vsel %vm72, %v64, %v69
  %v74 = vrsqrt.pop %v63
  %v75 = vmul.f32 %v74, %v63
  %v76 = vmul.f32 %v75, %v74
  %v77 = vmul.f32 0.5, %v76
  %v78 = vsub.f32 1.5, %v77
  %v79 = vmul.f32 %v74, %v78
  %vm80 = vweird.f32 %v63
  %vm81 = vweird.f32 %v74
  %vm82 = vmor %vm80, %vm81
  %v83 = vsel %vm82, %v74, %v79
  %v84 = vmul.f32 %v50, %v73
  %v85 = vmul.f32 %v51, %v83
  %v87 = vperm.slane %v32, 0
  %v89 = vmul.f32 %v84, %v87
  %v90 = vmul.f32 %v85, %v87
  %v92 = vperm.slane %v33, 0
  %v94 = vadd.f32 %v89, %v92
  %v95 = vadd.f32 %v90, %v92
  %v96 = vpack.c.bf16 %v95, %v94
  %v97 = vld [vmem:[%s4] sm:$0xf]
  %v98 = vld [vmem:[%s4 + $0x4] sm:$0xf]
  %v99 = vld [vmem:[%s4 + $0x8] sm:$0xf]
  %v100 = vld [vmem:[%s4 + $0xc] sm:$0xf]
  %v101 = vld [vmem:[%s5] sm:$0x1]
  %v103 = vperm.slane %v101, 0
  %v109 = vunpack.c.l.b16 %v97
  %v110 = vunpack.c.l.b16 %v98
  %v111 = vunpack.c.l.b16 %v99
  %v112 = vunpack.c.l.b16 %v100
  %v113 = vpack.c.b16 %v110, %v109
  %v114 = vpack.c.b16 %v112, %v111
  %v118 = vsel %vm34, %v96, 0
  %120 = vmatpush.bf16.msra.mxu0 0
  %121 = vmatpush.bf16.msra.mxu0 0
  %122 = vmatpush.bf16.msra.mxu0 0
  %123 = vmatpush.bf16.msra.mxu0 0
  %124 = vmatpush.bf16.msra.mxu0 0
  %125 = vmatpush.bf16.msra.mxu0 0
  %126 = vmatpush.bf16.msra.mxu0 %v114
  %127 = vmatpush.bf16.msra.mxu0 %v113
  %128 = vmatmul.bf16.gmra.mxu0 %v118
  %v129 = vpop.f32.mrf.mxu0
  %v130 = vadd.f32 %v103, %v129
  %v131 = vpop.f32.mrf.mxu0
  %v132 = vadd.f32 %v103, %v131
  %133 = vdwg.mxu0
  %v134 = vmax.f32 %v130, 0.0
  %v135 = vmax.f32 %v132, 0.0
  %p136 = scmp.eq.s32.totalorder 0, 0
  // Predicated region
  $region26: #{transformer_forward.12} parent=0 // pred_check
    %p137 = pneg %p136
  $region27: #{transformer_forward.12} parent=0 // pred_check_branch
    %139 = sbr.rel (%p137) target = $region29
  $region28: #{transformer_forward.12} parent=0 // pred_region
    %140 = vst.msk [vmem:[%s6] sm:$0xff] %vm34, %v94
    %141 = vst.msk [vmem:[%s6 + $0x8] sm:$0xff] %vm34, %v95
  $region29: #{transformer_forward.12} parent=0 // pred_fallthru
    _
  %v142 = vpack.c.bf16 %v134, %v134
  %v143 = vpack.c.bf16 %v135, %v135
  %vm144 = vcmask 519168
  %145 = vst.msk [vmem:[%s7] sm:$0xf] %vm144, %v142
  %146 = vst.msk [vmem:[%s7 + $0x4] sm:$0xf] %vm144, %v143
  // Predicated region
  $region30: #{transformer_forward.12} parent=0 // pred_check
    _
  $region31: #{transformer_forward.12} parent=0 // pred_check_branch
    %148 = sbr.rel (0) target = $region33
  $region32: #{transformer_forward.12} parent=0 // pred_region
    _
  $region33: #{transformer_forward.12} parent=0 // pred_fallthru
    _
  // Predicated region
  $region34: #{transformer_forward.12} parent=0 // pred_check
    _
  $region35: #{transformer_forward.12} parent=0 // pred_check_branch
    %150 = sbr.rel (0) target = $region37
  $region36: #{transformer_forward.12} parent=0 // pred_region
    _
  $region37: #{transformer_forward.12} parent=0 // pred_fallthru
    _
  // Predicated region
  $region38: #{transformer_forward.12} parent=0 // pred_check
    _
  $region39: #{transformer_forward.12} parent=0 // pred_check_branch
    %152 = sbr.rel (0) target = $region41
  $region40: #{transformer_forward.12} parent=0 // pred_region
    _
  $region41: #{transformer_forward.12} parent=0 // pred_fallthru
    _
  // Predicated region
  $region42: #{transformer_forward.12} parent=0 // pred_check
    _
  $region43: #{transformer_forward.12} parent=0 // pred_check_branch
    %154 = sbr.rel (0) target = $region45
  $region44: #{transformer_forward.12} parent=0 // pred_region
    _
  $region45: #{transformer_forward.12} parent=0 // pred_fallthru
    _

// kernel: transformer_forward.13
$region0: #{transformer_forward.13}
  #allocation0 [shape = 'u32[]', space=smem, size = 0x4, offset = 0x4, fixed_abs, tag = 'smem constant byte address 0x4 - core index']
  #allocation1 [shape = 'u32[72,128]{1,0:T(1,128)}', space=vmem, size = 0x9000, scoped, tag = 'internal scratch']
  %s0 = inlined_call_operand.vmem [shape: bf16[16,64], index: 0, kind: input, shape index: {}]
  %s1 = inlined_call_operand.vmem [shape: f32[16,32], index: 1, kind: input, shape index: {}]
  %s2 = inlined_call_operand.vmem [shape: bf16[64,32], index: 2, kind: input, shape index: {}]
  %s3 = inlined_call_operand.vmem [shape: f32[1,32], index: 3, kind: input, shape index: {}]
  %s4 = inlined_call_operand.vmem [shape: f32[16,32], index: 4, kind: output, shape index: {}]
  %s5 = sld [smem:[#allocation0]]
  $region26: #{transformer_forward.13} parent=0
    _
  %s7 = ssub.s32 1, %s5
  %s8 = scalar_select 0, %s7, %s5
  // Predicated region
  $region2: #{transformer_forward.13} parent=0 // pred_check
    _
  $region3: #{transformer_forward.13} parent=0 // pred_check_branch
    %10 = sbr.rel (0) target = $region5
  $region4: #{transformer_forward.13} parent=0 // pred_region
    _
  $region5: #{transformer_forward.13} parent=0 // pred_fallthru
    _
  // Predicated region
  $region6: #{transformer_forward.13} parent=0 // pred_check
    _
  $region7: #{transformer_forward.13} parent=0 // pred_check_branch
    %12 = sbr.rel (0) target = $region9
  $region8: #{transformer_forward.13} parent=0 // pred_region
    _
  $region9: #{transformer_forward.13} parent=0 // pred_fallthru
    _
  // Predicated region
  $region10: #{transformer_forward.13} parent=0 // pred_check
    _
  $region11: #{transformer_forward.13} parent=0 // pred_check_branch
    %14 = sbr.rel (0) target = $region13
  $region12: #{transformer_forward.13} parent=0 // pred_region
    _
  $region13: #{transformer_forward.13} parent=0 // pred_fallthru
    _
  // Predicated region
  $region14: #{transformer_forward.13} parent=0 // pred_check
    _
  $region15: #{transformer_forward.13} parent=0 // pred_check_branch
    %16 = sbr.rel (0) target = $region17
  $region16: #{transformer_forward.13} parent=0 // pred_region
    _
  $region17: #{transformer_forward.13} parent=0 // pred_fallthru
    _
  %v18 = vld [vmem:[%s1] sm:$0xff]
  %v19 = vld [vmem:[%s1 + $0x8] sm:$0xff]
  %v20 = vld [vmem:[%s3] sm:$0x1]
  %v22 = vperm.slane %v20, 0
  %v24 = vadd.f32 %v18, %v22
  %v25 = vadd.f32 %v19, %v22
  %v26 = vld [vmem:[%s0] sm:$0xf]
  %v27 = vld [vmem:[%s0 + $0x4] sm:$0xf]
  %v28 = vld [vmem:[%s2] sm:$0xf]
  %v29 = vld [vmem:[%s2 + $0x4] sm:$0xf]
  %v30 = vld [vmem:[%s2 + $0x8] sm:$0xf]
  %v31 = vld [vmem:[%s2 + $0xc] sm:$0xf]
  %v32 = vld [vmem:[%s2 + $0x10] sm:$0xf]
  %v33 = vld [vmem:[%s2 + $0x14] sm:$0xf]
  %v34 = vld [vmem:[%s2 + $0x18] sm:$0xf]
  %v35 = vld [vmem:[%s2 + $0x1c] sm:$0xf]
  %v38 = vunpack.c.l.b16 %v26
  %v39 = vunpack.c.l.b16 %v27
  %v40 = vpack.c.b16 %v39, %v38
  %v49 = vunpack.c.l.b16 %v28
  %v50 = vunpack.c.l.b16 %v29
  %v51 = vunpack.c.l.b16 %v30
  %v52 = vunpack.c.l.b16 %v31
  %v53 = vunpack.c.l.b16 %v32
  %v54 = vunpack.c.l.b16 %v33
  %v55 = vunpack.c.l.b16 %v34
  %v56 = vunpack.c.l.b16 %v35
  %v57 = vpack.c.b16 %v50, %v49
  %v58 = vpack.c.b16 %v52, %v51
  %v59 = vpack.c.b16 %v54, %v53
  %v60 = vpack.c.b16 %v56, %v55
  %vm65 = vcmask 523264
  %v67 = vsel %vm65, %v40, 0
  %69 = vmatpush.bf16.msra.mxu0 0
  %70 = vmatpush.bf16.msra.mxu0 0
  %71 = vmatpush.bf16.msra.mxu0 0
  %72 = vmatpush.bf16.msra.mxu0 0
  %73 = vmatpush.bf16.msra.mxu0 %v60
  %74 = vmatpush.bf16.msra.mxu0 %v59
  %75 = vmatpush.bf16.msra.mxu0 %v58
  %76 = vmatpush.bf16.msra.mxu0 %v57
  %77 = vmatmul.bf16.gmra.mxu0 %v67
  %v78 = vpop.f32.mrf.mxu0
  %v79 = vadd.f32 0.0, %v78
  %v80 = vpop.f32.mrf.mxu0
  %v81 = vadd.f32 0.0, %v80
  %82 = vdwg.mxu0
  %v83 = vadd.f32 %v24, %v79
  %v84 = vadd.f32 %v25, %v81
  %vm85 = vcmask 261120
  %86 = vst.msk [vmem:[%s4] sm:$0xff] %vm85, %v83
  %87 = vst.msk [vmem:[%s4 + $0x8] sm:$0xff] %vm85, %v84
  // Predicated region
  $region18: #{transformer_forward.13} parent=0 // pred_check
    _
  $region19: #{transformer_forward.13} parent=0 // pred_check_branch
    %89 = sbr.rel (0) target = $region21
  $region20: #{transformer_forward.13} parent=0 // pred_region
    _
  $region21: #{transformer_forward.13} parent=0 // pred_fallthru
    _
  // Predicated region
  $region22: #{transformer_forward.13} parent=0 // pred_check
    _
  $region23: #{transformer_forward.13} parent=0 // pred_check_branch
    %91 = sbr.rel (0) target = $region25
  $region24: #{transformer_forward.13} parent=0 // pred_region
    _
  $region25: #{transformer_forward.13} parent=0 // pred_fallthru
    _

// kernel: transformer_forward.19
$region0: #{transformer_forward.19}
  #allocation0 [shape = 'u32[]', space=smem, size = 0x4, offset = 0x4, fixed_abs, tag = 'smem constant byte address 0x4 - core index']
  #allocation1 [shape = 'u32[72,128]{1,0:T(1,128)}', space=vmem, size = 0x9000, scoped, tag = 'internal scratch']
  %s0 = inlined_call_operand.vmem [shape: f32[16,32], index: 0, kind: input, shape index: {}]
  %s1 = inlined_call_operand.vmem [shape: f32[1,32], index: 1, kind: input, shape index: {}]
  %s2 = inlined_call_operand.vmem [shape: f32[1,32], index: 2, kind: input, shape index: {}]
  %s3 = inlined_call_operand.vmem [shape: bf16[32,11], index: 3, kind: input, shape index: {}]
  %s4 = inlined_call_operand.vmem [shape: f32[1,11], index: 4, kind: input, shape index: {}]
  %s5 = inlined_call_operand.vmem [shape: f32[16,1], index: 5, kind: input, shape index: {}]
  %s6 = inlined_call_operand.hbm [shape: f32[16,11], index: 6, kind: output, shape index: {}]
  %s7 = sld [smem:[#allocation0]]
  $region34: #{transformer_forward.19} parent=0
    _
  %s9 = ssub.s32 1, %s7
  %s10 = scalar_select 0, %s9, %s7
  $region1: #{transformer_forward.19} parent=0
    #allocation2 [shape = 'u8[8192]{0}', space=vmem, size = 0x2000, scoped, tag = 'output window, operand 0, single buffered']
    #allocation3 [shape = 's32[1]{0}', space=sflag, size = 0x4, scoped, tag = 'scoped memory for transformer_forward.19']
    %11 = vsyncpa [#allocation3], 0
    // Predicated region
    $region2: #{transformer_forward.19} parent=1 // pred_check
      _
    $region3: #{transformer_forward.19} parent=1 // pred_check_branch
      %13 = sbr.rel (0) target = $region5
    $region4: #{transformer_forward.19} parent=1 // pred_region
      _
    $region5: #{transformer_forward.19} parent=1 // pred_fallthru
      _
    // Predicated region
    $region6: #{transformer_forward.19} parent=1 // pred_check
      _
    $region7: #{transformer_forward.19} parent=1 // pred_check_branch
      %15 = sbr.rel (0) target = $region9
    $region8: #{transformer_forward.19} parent=1 // pred_region
      _
    $region9: #{transformer_forward.19} parent=1 // pred_fallthru
      _
    // Predicated region
    $region10: #{transformer_forward.19} parent=1 // pred_check
      _
    $region11: #{transformer_forward.19} parent=1 // pred_check_branch
      %17 = sbr.rel (0) target = $region13
    $region12: #{transformer_forward.19} parent=1 // pred_region
      _
    $region13: #{transformer_forward.19} parent=1 // pred_fallthru
      _
    // Predicated region
    $region14: #{transformer_forward.19} parent=1 // pred_check
      _
    $region15: #{transformer_forward.19} parent=1 // pred_check_branch
      %19 = sbr.rel (0) target = $region17
    $region16: #{transformer_forward.19} parent=1 // pred_region
      _
    $region17: #{transformer_forward.19} parent=1 // pred_fallthru
      _
    // Predicated region
    $region18: #{transformer_forward.19} parent=1 // pred_check
      _
    $region19: #{transformer_forward.19} parent=1 // pred_check_branch
      %21 = sbr.rel (0) target = $region21
    $region20: #{transformer_forward.19} parent=1 // pred_region
      _
    $region21: #{transformer_forward.19} parent=1 // pred_fallthru
      _
    // Predicated region
    $region22: #{transformer_forward.19} parent=1 // pred_check
      _
    $region23: #{transformer_forward.19} parent=1 // pred_check_branch
      %23 = sbr.rel (0) target = $region25
    $region24: #{transformer_forward.19} parent=1 // pred_region
      _
    $region25: #{transformer_forward.19} parent=1 // pred_fallthru
      _
    %v25 = vld [vmem:[%s0] sm:$0xff]
    %v26 = vld [vmem:[%s0 + $0x8] sm:$0xff]
    %v27 = vld [vmem:[%s1] sm:$0x1]
    %v28 = vld [vmem:[%s2] sm:$0x1]
    %vm29 = vcmask 261120
    %v30 = vsel %vm29, %v25, 0.0
    %31 = vadd.xlane.f32.xlu0 %v30
    %v32 = vpop.xlane.xlu0 %31
    %v33 = vsel %vm29, %v26, 0.0
    %34 = vadd.xlane.f32.xlu0 %v33
    %v35 = vpop.xlane.xlu0 %34
    %v36 = vrcp.pop 32.0
    %v37 = vmul.f32 32.0, %v36
    %v38 = vsub.f32 1.0, %v37
    %v39 = vmul.f32 %v36, %v38
    %v40 = vadd.f32 %v36, %v39
    %vm41 = vweird.f32 %v36
    %v42 = vsel %vm41, %v36, %v40
    %v43 = vmul.f32 %v32, %v42
    %v44 = vmul.f32 %v35, %v42
    %v45 = vsub.f32 %v25, %v43
    %v46 = vsub.f32 %v26, %v44
    %v47 = vmul.f32 %v45, %v45
    %v48 = vmul.f32 %v46, %v46
    %v49 = vsel %vm29, %v47, 0.0
    %50 = vadd.xlane.f32.xlu0 %v49
    %v51 = vpop.xlane.xlu0 %50
    %v52 = vsel %vm29, %v48, 0.0
    %53 = vadd.xlane.f32.xlu0 %v52
    %v54 = vpop.xlane.xlu0 %53
    %v55 = vmul.f32 %v51, %v42
    %v56 = vmul.f32 %v54, %v42
    %v57 = vadd.f32 %v55, 1e-05
    %v58 = vadd.f32 %v56, 1e-05
    %v59 = vrsqrt.pop %v57
    %v60 = vmul.f32 %v59, %v57
    %v61 = vmul.f32 %v60, %v59
    %v62 = vmul.f32 0.5, %v61
    %v63 = vsub.f32 1.5, %v62
    %v64 = vmul.f32 %v59, %v63
    %vm65 = vweird.f32 %v57
    %vm66 = vweird.f32 %v59
    %vm67 = vmor %vm65, %vm66
    %v68 = vsel %vm67, %v59, %v64
    %v69 = vrsqrt.pop %v58
    %v70 = vmul.f32 %v69, %v58
    %v71 = vmul.f32 %v70, %v69
    %v72 = vmul.f32 0.5, %v71
    %v73 = vsub.f32 1.5, %v72
    %v74 = vmul.f32 %v69, %v73
    %vm75 = vweird.f32 %v58
    %vm76 = vweird.f32 %v69
    %vm77 = vmor %vm75, %vm76
    %v78 = vsel %vm77, %v69, %v74
    %v79 = vmul.f32 %v45, %v68
    %v80 = vmul.f32 %v46, %v78
    %v82 = vperm.slane %v27, 0
    %v84 = vmul.f32 %v79, %v82
    %v85 = vmul.f32 %v80, %v82
    %v87 = vperm.slane %v28, 0
    %v89 = vadd.f32 %v84, %v87
    %v90 = vadd.f32 %v85, %v87
    %v91 = vpack.c.bf16 %v90, %v89
    %v92 = vld [vmem:[%s3] sm:$0xf]
    %v93 = vld [vmem:[%s3 + $0x4] sm:$0xf]
    %v94 = vld [vmem:[%s3 + $0x8] sm:$0xf]
    %v95 = vld [vmem:[%s3 + $0xc] sm:$0xf]
    %v96 = vld [vmem:[%s4] sm:$0x1]
    %v98 = vperm.slane %v96, 0
    %v104 = vunpack.c.l.b16 %v92
    %v105 = vunpack.c.l.b16 %v93
    %v106 = vunpack.c.l.b16 %v94
    %v107 = vunpack.c.l.b16 %v95
    %v108 = vpack.c.b16 %v105, %v104
    %v109 = vpack.c.b16 %v107, %v106
    %v113 = vsel %vm29, %v91, 0
    %115 = vmatpush.bf16.msra.mxu0 0
    %116 = vmatpush.bf16.msra.mxu0 0
    %117 = vmatpush.bf16.msra.mxu0 0
    %118 = vmatpush.bf16.msra.mxu0 0
    %119 = vmatpush.bf16.msra.mxu0 0
    %120 = vmatpush.bf16.msra.mxu0 0
    %121 = vmatpush.bf16.msra.mxu0 %v109
    %122 = vmatpush.bf16.msra.mxu0 %v108
    %123 = vmatmul.bf16.gmra.mxu0 %v113
    %v124 = vpop.f32.mrf.mxu0
    %v125 = vadd.f32 %v98, %v124
    %v126 = vpop.f32.mrf.mxu0
    %v127 = vadd.f32 %v98, %v126
    %128 = vdwg.mxu0
    %v129 = vld [vmem:[%s5] sm:$0xff]
    %v130 = vld [vmem:[%s5 + $0x8] sm:$0xff]
    %132 = vset.pattern.permute.xlu0 0
    %133 = vperm.xlu0 %132, %v129
    %v134 = vpop.permute.xlu0 %133
    %137 = vset.pattern.permute.xlu0 0
    %138 = vperm.xlu0 %137, %v130
    %v139 = vpop.permute.xlu0 %138
    %v141 = vsub.f32 %v125, %v134
    %v142 = vsub.f32 %v127, %v139
    %vm143 = vcmask 89088
    %144 = vst.msk [vmem:[#allocation2] sm:$0xff] %vm143, %v141
    %145 = vst.msk [vmem:[#allocation2 + $0x8] sm:$0xff] %vm143, %v142
    // Predicated region
    $region26: #{transformer_forward.19} parent=1 // pred_check
      _
    $region27: #{transformer_forward.19} parent=1 // pred_check_branch
      %147 = sbr.rel (0) target = $region29
    $region28: #{transformer_forward.19} parent=1 // pred_region
      %149 = vsyncadd [#allocation3], 0
      %s150 = sshll.u32 [#allocation2], 4
      %s151 = int_to_ptr.vmem [resolvable:$true] %s150
      %s152 = sshll.u32 %s6, 4
      %s153 = int_to_ptr.hbm [resolvable:$true] %s152
      %158 = dma.vmem_to_hbm [thread:$0]  %s151, 256, %s153, [#allocation3], 128, 128, 8
    $region29: #{transformer_forward.19} parent=1 // pred_fallthru
      _
    // Predicated region
    $region30: #{transformer_forward.19} parent=1 // pred_check
      _
    $region31: #{transformer_forward.19} parent=1 // pred_check_branch
      %160 = sbr.rel (0) target = $region33
    $region32: #{transformer_forward.19} parent=1 // pred_region
      %162 = dma.done [#allocation3], 256
    $region33: #{transformer_forward.19} parent=1 // pred_fallthru
      _
    %163 = vsyncpa [#allocation3], 1

// kernel: transformer_forward.18
$region0: #{transformer_forward.18}
  #allocation0 [shape = 'u32[]', space=smem, size = 0x4, offset = 0x4, fixed_abs, tag = 'smem constant byte address 0x4 - core index']
  #allocation1 [shape = 'u32[72,128]{1,0:T(1,128)}', space=vmem, size = 0x9000, scoped, tag = 'internal scratch']
  #allocation2 [shape = 'f32[16,1]{1,0:T(8,128)}', space=vmem, size = 0x2000, scoped, tag = 'scratch operand']
  #allocation3 [shape = 'f32[16,1]{1,0:T(8,128)}', space=vmem, size = 0x2000, scoped, tag = 'scratch operand']
  %s0 = inlined_call_operand.vmem [shape: f32[16,32], index: 0, kind: input, shape index: {}]
  %s1 = inlined_call_operand.vmem [shape: f32[1,32], index: 1, kind: input, shape index: {}]
  %s2 = inlined_call_operand.vmem [shape: f32[1,32], index: 2, kind: input, shape index: {}]
  %s3 = inlined_call_operand.vmem [shape: bf16[32,11], index: 3, kind: input, shape index: {}]
  %s4 = inlined_call_operand.vmem [shape: f32[1,11], index: 4, kind: input, shape index: {}]
  %s5 = inlined_call_operand.vmem [shape: f32[16,1], index: 5, kind: output, shape index: {}]
  %s6 = sld [smem:[#allocation0]]
  $region38: #{transformer_forward.18} parent=0
    _
  %s8 = ssub.s32 1, %s6
  %s9 = scalar_select 0, %s8, %s6
  // Predicated region
  $region2: #{transformer_forward.18} parent=0 // pred_check
    _
  $region3: #{transformer_forward.18} parent=0 // pred_check_branch
    %11 = sbr.rel (0) target = $region5
  $region4: #{transformer_forward.18} parent=0 // pred_region
    _
  $region5: #{transformer_forward.18} parent=0 // pred_fallthru
    _
  // Predicated region
  $region6: #{transformer_forward.18} parent=0 // pred_check
    _
  $region7: #{transformer_forward.18} parent=0 // pred_check_branch
    %13 = sbr.rel (0) target = $region9
  $region8: #{transformer_forward.18} parent=0 // pred_region
    _
  $region9: #{transformer_forward.18} parent=0 // pred_fallthru
    _
  // Predicated region
  $region10: #{transformer_forward.18} parent=0 // pred_check
    _
  $region11: #{transformer_forward.18} parent=0 // pred_check_branch
    %15 = sbr.rel (0) target = $region13
  $region12: #{transformer_forward.18} parent=0 // pred_region
    _
  $region13: #{transformer_forward.18} parent=0 // pred_fallthru
    _
  // Predicated region
  $region14: #{transformer_forward.18} parent=0 // pred_check
    _
  $region15: #{transformer_forward.18} parent=0 // pred_check_branch
    %17 = sbr.rel (0) target = $region17
  $region16: #{transformer_forward.18} parent=0 // pred_region
    _
  $region17: #{transformer_forward.18} parent=0 // pred_fallthru
    _
  // Predicated region
  $region18: #{transformer_forward.18} parent=0 // pred_check
    _
  $region19: #{transformer_forward.18} parent=0 // pred_check_branch
    %19 = sbr.rel (0) target = $region21
  $region20: #{transformer_forward.18} parent=0 // pred_region
    _
  $region21: #{transformer_forward.18} parent=0 // pred_fallthru
    _
  %p21 = scmp.eq.s32.totalorder 0, 0
  // Predicated region
  $region22: #{transformer_forward.18} parent=0 // pred_check
    %p22 = pneg %p21
  $region23: #{transformer_forward.18} parent=0 // pred_check_branch
    %24 = sbr.rel (%p22) target = $region25
  $region24: #{transformer_forward.18} parent=0 // pred_region
    %vm25 = vcmask 7168
    %26 = vst.msk [vmem:[#allocation2] sm:$0xff] %vm25, -inf
    %27 = vst.msk [vmem:[#allocation2 + $0x8] sm:$0xff] %vm25, -inf
    %28 = vst.msk [vmem:[#allocation3] sm:$0xff] %vm25, 0.0
    %29 = vst.msk [vmem:[#allocation3 + $0x8] sm:$0xff] %vm25, 0.0
  $region25: #{transformer_forward.18} parent=0 // pred_fallthru
    _
  %v30 = vld [vmem:[%s0] sm:$0xff]
  %v31 = vld [vmem:[%s0 + $0x8] sm:$0xff]
  %v32 = vld [vmem:[%s1] sm:$0x1]
  %v33 = vld [vmem:[%s2] sm:$0x1]
  %vm34 = vcmask 261120
  %v35 = vsel %vm34, %v30, 0.0
  %36 = vadd.xlane.f32.xlu0 %v35
  %v37 = vpop.xlane.xlu0 %36
  %v38 = vsel %vm34, %v31, 0.0
  %39 = vadd.xlane.f32.xlu0 %v38
  %v40 = vpop.xlane.xlu0 %39
  %v41 = vrcp.pop 32.0
  %v42 = vmul.f32 32.0, %v41
  %v43 = vsub.f32 1.0, %v42
  %v44 = vmul.f32 %v41, %v43
  %v45 = vadd.f32 %v41, %v44
  %vm46 = vweird.f32 %v41
  %v47 = vsel %vm46, %v41, %v45
  %v48 = vmul.f32 %v37, %v47
  %v49 = vmul.f32 %v40, %v47
  %v50 = vsub.f32 %v30, %v48
  %v51 = vsub.f32 %v31, %v49
  %v52 = vmul.f32 %v50, %v50
  %v53 = vmul.f32 %v51, %v51
  %v54 = vsel %vm34, %v52, 0.0
  %55 = vadd.xlane.f32.xlu0 %v54
  %v56 = vpop.xlane.xlu0 %55
  %v57 = vsel %vm34, %v53, 0.0
  %58 = vadd.xlane.f32.xlu0 %v57
  %v59 = vpop.xlane.xlu0 %58
  %v60 = vmul.f32 %v56, %v47
  %v61 = vmul.f32 %v59, %v47
  %v62 = vadd.f32 %v60, 1e-05
  %v63 = vadd.f32 %v61, 1e-05
  %v64 = vrsqrt.pop %v62
  %v65 = vmul.f32 %v64, %v62
  %v66 = vmul.f32 %v65, %v64
  %v67 = vmul.f32 0.5, %v66
  %v68 = vsub.f32 1.5, %v67
  %v69 = vmul.f32 %v64, %v68
  %vm70 = vweird.f32 %v62
  %vm71 = vweird.f32 %v64
  %vm72 = vmor %vm70, %vm71
  %v73 = vsel %vm72, %v64, %v69
  %v74 = vrsqrt.pop %v63
  %v75 = vmul.f32 %v74, %v63
  %v76 = vmul.f32 %v75, %v74
  %v77 = vmul.f32 0.5, %v76
  %v78 = vsub.f32 1.5, %v77
  %v79 = vmul.f32 %v74, %v78
  %vm80 = vweird.f32 %v63
  %vm81 = vweird.f32 %v74
  %vm82 = vmor %vm80, %vm81
  %v83 = vsel %vm82, %v74, %v79
  %v84 = vmul.f32 %v50, %v73
  %v85 = vmul.f32 %v51, %v83
  %v87 = vperm.slane %v32, 0
  %v89 = vmul.f32 %v84, %v87
  %v90 = vmul.f32 %v85, %v87
  %v92 = vperm.slane %v33, 0
  %v94 = vadd.f32 %v89, %v92
  %v95 = vadd.f32 %v90, %v92
  %v96 = vpack.c.bf16 %v95, %v94
  %v97 = vld [vmem:[%s3] sm:$0xf]
  %v98 = vld [vmem:[%s3 + $0x4] sm:$0xf]
  %v99 = vld [vmem:[%s3 + $0x8] sm:$0xf]
  %v100 = vld [vmem:[%s3 + $0xc] sm:$0xf]
  %v101 = vld [vmem:[%s4] sm:$0x1]
  %v103 = vperm.slane %v101, 0
  %v109 = vunpack.c.l.b16 %v97
  %v110 = vunpack.c.l.b16 %v98
  %v111 = vunpack.c.l.b16 %v99
  %v112 = vunpack.c.l.b16 %v100
  %v113 = vpack.c.b16 %v110, %v109
  %v114 = vpack.c.b16 %v112, %v111
  %v118 = vsel %vm34, %v96, 0
  %120 = vmatpush.bf16.msra.mxu0 0
  %121 = vmatpush.bf16.msra.mxu0 0
  %122 = vmatpush.bf16.msra.mxu0 0
  %123 = vmatpush.bf16.msra.mxu0 0
  %124 = vmatpush.bf16.msra.mxu0 0
  %125 = vmatpush.bf16.msra.mxu0 0
  %126 = vmatpush.bf16.msra.mxu0 %v114
  %127 = vmatpush.bf16.msra.mxu0 %v113
  %128 = vmatmul.bf16.gmra.mxu0 %v118
  %v129 = vpop.f32.mrf.mxu0
  %v130 = vadd.f32 %v103, %v129
  %v131 = vpop.f32.mrf.mxu0
  %v132 = vadd.f32 %v103, %v131
  %133 = vdwg.mxu0
  %v134 = vld [vmem:[#allocation2] sm:$0xff]
  %v135 = vld [vmem:[#allocation2 + $0x8] sm:$0xff]
  %vm136 = vcmask 89088
  %v137 = vsel %vm136, %v130, -inf
  %138 = vmax.xlane.f32.xlu0 %v137
  %v139 = vpop.xlane.xlu0 %138
  %v140 = vsel %vm136, %v132, -inf
  %141 = vmax.xlane.f32.xlu0 %v140
  %v142 = vpop.xlane.xlu0 %141
  %v143 = vmax.f32 %v134, %v139
  %v144 = vmax.f32 %v135, %v142
  %v145 = vld [vmem:[#allocation3] sm:$0xff]
  %v146 = vld [vmem:[#allocation3 + $0x8] sm:$0xff]
  %v147 = vsub.f32 %v134, %v143
  %v148 = vsub.f32 %v135, %v144
  %v149 = vmul.f32 %v147, 1.442695
  %v150 = vpow.pop %v149
  %v151 = vmul.f32 %v148, 1.442695
  %v152 = vpow.pop %v151
  %v153 = vmul.f32 %v145, %v150
  %v154 = vmul.f32 %v146, %v152
  %156 = vset.pattern.permute.xlu0 0
  %157 = vperm.xlu0 %156, %v143
  %v158 = vpop.permute.xlu0 %157
  %161 = vset.pattern.permute.xlu0 0
  %162 = vperm.xlu0 %161, %v144
  %v163 = vpop.permute.xlu0 %162
  %v165 = vsub.f32 %v130, %v158
  %v166 = vsub.f32 %v132, %v163
  %v167 = vmul.f32 %v165, 1.442695
  %v168 = vpow.pop %v167
  %v169 = vmul.f32 %v166, 1.442695
  %v170 = vpow.pop %v169
  %v171 = vsel %vm136, %v168, 0.0
  %172 = vadd.xlane.f32.xlu0 %v171
  %v173 = vpop.xlane.xlu0 %172
  %v174 = vsel %vm136, %v170, 0.0
  %175 = vadd.xlane.f32.xlu0 %v174
  %v176 = vpop.xlane.xlu0 %175
  %v177 = vadd.f32 %v153, %v173
  %v178 = vadd.f32 %v154, %v176
  %vm179 = vcmask 7168
  %180 = vst.msk [vmem:[#allocation3] sm:$0xff] %vm179, %v177
  %181 = vst.msk [vmem:[#allocation3 + $0x8] sm:$0xff] %vm179, %v178
  %182 = vst.msk [vmem:[#allocation2] sm:$0xff] %vm179, %v143
  %183 = vst.msk [vmem:[#allocation2 + $0x8] sm:$0xff] %vm179, %v144
  // Predicated region
  $region26: #{transformer_forward.18} parent=0 // pred_check
    %p184 = pneg %p21
  $region27: #{transformer_forward.18} parent=0 // pred_check_branch
    %186 = sbr.rel (%p184) target = $region29
  $region28: #{transformer_forward.18} parent=0 // pred_region
    %v187 = vld [vmem:[#allocation2] sm:$0xff]
    %v188 = vld [vmem:[#allocation2 + $0x8] sm:$0xff]
    %v189 = vld [vmem:[#allocation3] sm:$0xff]
    %v190 = vld [vmem:[#allocation3 + $0x8] sm:$0xff]
    %v191 = vlog2.pop %v189
    %v192 = vmul.f32 %v191, 0.6931472
    %v193 = vlog2.pop %v190
    %v194 = vmul.f32 %v193, 0.6931472
    %v195 = vadd.f32 %v187, %v192
    %v196 = vadd.f32 %v188, %v194
    %197 = vst.msk [vmem:[%s5] sm:$0xff] %vm179, %v195
    %198 = vst.msk [vmem:[%s5 + $0x8] sm:$0xff] %vm179, %v196
  $region29: #{transformer_forward.18} parent=0 // pred_fallthru
    _
  // Predicated region
  $region30: #{transformer_forward.18} parent=0 // pred_check
    _
  $region31: #{transformer_forward.18} parent=0 // pred_check_branch
    %200 = sbr.rel (0) target = $region33
  $region32: #{transformer_forward.18} parent=0 // pred_region
    _
  $region33: #{transformer_forward.18} parent=0 // pred_fallthru
    _
  // Predicated region
  $region34: #{transformer_forward.18} parent=0 // pred_check
    _
  $region35: #{transformer_forward.18} parent=0 // pred_check_branch
    %202 = sbr.rel (0) target = $region37
  $region36: #{transformer_forward.18} parent=0 // pred_region
    _
  $region37: #{transformer_forward.18} parent=0 // pred_fallthru
    _

</llo_original>
